<compile_context>
chip_gen: v5e
topology: v5e:2x2
jax: 0.10.0
libtpu: 0.0.40
codegen_flags: <defaults>
</compile_context>

<pallas_src>
import jax
import jax.numpy as jnp
from jax.experimental import pallas as pl
from jax.experimental.pallas import tpu as pltpu

NUM_BLOCKS = 10                       # Anonymizer builds 10 ResBlocks
MAX_ROW_TILE = 512                    # max rows (N*T) per grid step
LANE = 128                            # TPU lane width: pad feature axis to this
MIN_ROW_STEPS = 2                     # v7x has 2 TensorCores: aim for >=2 steps
RESIDENT_WEIGHT_BYTES_LIMIT = 24 * 2**20   # above this, stream weights per block


def _round_up(a, b):
    return ((a + b - 1) // b) * b


def _cdiv(a, b):
    return (a + b - 1) // b


# ---------------------------------------------------------------------------
# Resident-weights kernel: all 20 weight matrices live in VMEM, 10-block loop
# is statically unrolled inside the body.  Used while 2x (double-buffered)
# weights comfortably fit VMEM on every generation.
# ---------------------------------------------------------------------------
def _resident_kernel(x_ref, w1_ref, b1_ref, w2_ref, b2_ref, o_ref):
    # x_ref : (row_tile, F_pad)
    # w1_ref/w2_ref: (NUM_BLOCKS, F_pad, F_pad) pre-transposed: y = x @ W + b
    # b1_ref/b2_ref: (NUM_BLOCKS, F_pad) float32
    mm_dtype = w1_ref.dtype            # bf16 (default) or f32 (parity path)
    x = x_ref[...].astype(jnp.float32)
    for i in range(NUM_BLOCKS):        # static unroll; per-iter ref slices
        residual = x
        h = jnp.dot(x.astype(mm_dtype), w1_ref[i],
                    preferred_element_type=jnp.float32)
        h = jnp.maximum(h + b1_ref[i][None, :], 0.0)     # relu(fc1(x)), f32
        h = jnp.dot(h.astype(mm_dtype), w2_ref[i],
                    preferred_element_type=jnp.float32)
        h = jnp.maximum(h + b2_ref[i][None, :], 0.0)     # relu(fc2(.)), f32
        x = h + residual
    o_ref[...] = x.astype(o_ref.dtype)


# ---------------------------------------------------------------------------
# Streamed-weights kernel: grid = (row_tiles, NUM_BLOCKS).  One block's
# weights are DMA'd per grid step (auto double-buffered across the block
# axis); the activation is carried in a VMEM f32 scratch across the
# "arbitrary" block axis.  Keeps the VMEM footprint ~1/10th of the resident
# variant for large F (v7x / v5e safety).
# ---------------------------------------------------------------------------
def _streamed_kernel(x_ref, w1_ref, b1_ref, w2_ref, b2_ref, o_ref, acc_ref):
    # x_ref : (row_tile, F_pad)        (same tile revisited for every block j)
    # w1_ref/w2_ref: (1, F_pad, F_pad) this block's weights
    # b1_ref/b2_ref: (1, 1, F_pad)     this block's biases
    # acc_ref: (row_tile, F_pad) f32   activation carried across blocks
    j = pl.program_id(1)
    mm_dtype = w1_ref.dtype

    @pl.when(j == 0)
    def _():
        acc_ref[...] = x_ref[...].astype(jnp.float32)

    x = acc_ref[...]
    h = jnp.dot(x.astype(mm_dtype), w1_ref[0],
                preferred_element_type=jnp.float32)
    h = jnp.maximum(h + b1_ref[0], 0.0)
    h = jnp.dot(h.astype(mm_dtype), w2_ref[0],
                preferred_element_type=jnp.float32)
    h = jnp.maximum(h + b2_ref[0], 0.0)
    acc_ref[...] = h + x

    @pl.when(j == pl.num_programs(1) - 1)
    def _():
        o_ref[...] = acc_ref[...].astype(o_ref.dtype)


def anonymizer_forward(x, w1, b1, w2, b2, *, matmul_dtype=jnp.bfloat16,
                       force_streamed=False):
    """x: (N, C, T, V, M).  w1/w2: (10, F, F) pre-transposed so y = x @ W + b.
    b1/b2: (10, F) float32.

    matmul_dtype=jnp.bfloat16 (default) feeds the MXU bf16 path with f32
    accumulation (~2-3x matmul throughput on v5e/v6e/v7x, half the weight
    VMEM); pass jnp.float32 for exact parity with the PyTorch module."""
    N, C, T, V, M = x.shape
    F = C * V * M
    F_pad = _round_up(F, LANE)
    pad_f = F_pad - F

    # ---- glue: permute/reshape to the (R, F) slab the kernel consumes ----
    # (For the tiny production shapes this glue + call overhead dominates the
    #  ~0.5 MFLOP kernel; it is kept to a single transpose/reshape/pad chain
    #  so XLA can fuse it into one copy.)
    x2 = jnp.transpose(x, (0, 2, 1, 3, 4)).reshape(N * T, F)

    R = N * T
    # Balanced row tiling: at most MAX_ROW_TILE rows per step, <8 padded rows
    # per tile, and >=2 grid steps whenever possible so v7x's two TensorCores
    # both get work via dimension_semantics=("parallel", ...).
    n_tiles = _cdiv(R, MAX_ROW_TILE)
    if n_tiles < MIN_ROW_STEPS and R > 8:
        n_tiles = MIN_ROW_STEPS
    row_tile = _round_up(_cdiv(R, n_tiles), 8)
    R_pad = n_tiles * row_tile

    x2 = jnp.pad(x2, ((0, R_pad - R), (0, pad_f)))

    mm_bytes = jnp.dtype(matmul_dtype).itemsize
    act_bytes = jnp.dtype(x.dtype).itemsize

    w1p = jnp.pad(w1, ((0, 0), (0, pad_f), (0, pad_f))).astype(matmul_dtype)
    w2p = jnp.pad(w2, ((0, 0), (0, pad_f), (0, pad_f))).astype(matmul_dtype)
    b1p = jnp.pad(b1, ((0, 0), (0, pad_f))).astype(jnp.float32)   # (10, F_pad)
    b2p = jnp.pad(b2, ((0, 0), (0, pad_f))).astype(jnp.float32)

    # Resident weights are double-buffered by the default pipeline; switch to
    # the streamed variant once that footprint outgrows a v7x-safe budget.
    resident_weight_bytes = 2 * 2 * NUM_BLOCKS * F_pad * F_pad * mm_bytes
    streamed = force_streamed or (resident_weight_bytes
                                  > RESIDENT_WEIGHT_BYTES_LIMIT)

    # Advisory cost estimate for the XLA scheduler.
    flops = 2 * 2 * NUM_BLOCKS * R_pad * F_pad * F_pad \
        + 4 * NUM_BLOCKS * R_pad * F_pad
    bytes_accessed = (2 * R_pad * F_pad * act_bytes
                      + 2 * NUM_BLOCKS * F_pad * F_pad * mm_bytes
                      + 2 * NUM_BLOCKS * F_pad * 4)
    cost = pl.CostEstimate(flops=flops, transcendentals=0,
                           bytes_accessed=bytes_accessed)

    # Explicit VMEM budget (v5e default scoped is only 16 MiB; v7x physical
    # is 64 MiB).  Estimate the footprint and clamp to [32 MiB, 64 MiB].
    io_tile_bytes = 2 * 2 * row_tile * F_pad * act_bytes   # x/out, double-buf
    if streamed:
        need = (2 * 2 * F_pad * F_pad * mm_bytes            # w1/w2 block x2buf
                + 2 * 2 * 8 * F_pad * 4                     # bias blocks
                + io_tile_bytes
                + row_tile * F_pad * 4)                      # f32 carry scratch
    else:
        need = (resident_weight_bytes
                + 2 * 2 * NUM_BLOCKS * F_pad * 4             # biases x2buf
                + io_tile_bytes)
    vmem_limit = int(min(max(2 * need, 32 * 2**20), 64 * 2**20))

    if not streamed:
        out2 = pl.pallas_call(
            _resident_kernel,
            out_shape=jax.ShapeDtypeStruct((R_pad, F_pad), x.dtype),
            grid=(n_tiles,),
            in_specs=[
                pl.BlockSpec((row_tile, F_pad), lambda i: (i, 0)),
                pl.BlockSpec((NUM_BLOCKS, F_pad, F_pad), lambda i: (0, 0, 0)),
                pl.BlockSpec((NUM_BLOCKS, F_pad), lambda i: (0, 0)),
                pl.BlockSpec((NUM_BLOCKS, F_pad, F_pad), lambda i: (0, 0, 0)),
                pl.BlockSpec((NUM_BLOCKS, F_pad), lambda i: (0, 0)),
            ],
            out_specs=pl.BlockSpec((row_tile, F_pad), lambda i: (i, 0)),
            compiler_params=pltpu.CompilerParams(
                dimension_semantics=("parallel",),
                vmem_limit_bytes=vmem_limit),
            cost_estimate=cost,
        )(x2, w1p, b1p, w2p, b2p)
    else:
        # Stream one ResBlock's weights per grid step along an "arbitrary"
        # axis; the activation is carried in a VMEM scratch accumulator.
        b1s = b1p.reshape(NUM_BLOCKS, 1, F_pad)
        b2s = b2p.reshape(NUM_BLOCKS, 1, F_pad)
        out2 = pl.pallas_call(
            _streamed_kernel,
            out_shape=jax.ShapeDtypeStruct((R_pad, F_pad), x.dtype),
            grid=(n_tiles, NUM_BLOCKS),
            in_specs=[
                pl.BlockSpec((row_tile, F_pad), lambda i, j: (i, 0)),
                pl.BlockSpec((1, F_pad, F_pad), lambda i, j: (j, 0, 0)),
                pl.BlockSpec((1, 1, F_pad), lambda i, j: (j, 0, 0)),
                pl.BlockSpec((1, F_pad, F_pad), lambda i, j: (j, 0, 0)),
                pl.BlockSpec((1, 1, F_pad), lambda i, j: (j, 0, 0)),
            ],
            out_specs=pl.BlockSpec((row_tile, F_pad), lambda i, j: (i, 0)),
            scratch_shapes=[pltpu.VMEM((row_tile, F_pad), jnp.float32)],
            compiler_params=pltpu.CompilerParams(
                dimension_semantics=("parallel", "arbitrary"),
                vmem_limit_bytes=vmem_limit),
            cost_estimate=cost,
        )(x2, w1p, b1s, w2p, b2s)

    out2 = out2[:R, :F]
    # glue: back to (N, C, T, V, M)
    return jnp.transpose(out2.reshape(N, T, C, V, M), (0, 2, 1, 3, 4))


def anonymizer_reference(x, w1, b1, w2, b2, *, matmul_dtype=jnp.float32):
    """Pure-JAX reference mirroring the PyTorch forward (optionally with the
    same bf16-input / f32-accumulate matmuls as the fast kernel path)."""
    N, C, T, V, M = x.shape
    F = C * V * M
    h = jnp.transpose(x, (0, 2, 1, 3, 4)).reshape(N, T, F).astype(jnp.float32)
    for i in range(NUM_BLOCKS):
        res = h
        t = jnp.dot(h.astype(matmul_dtype), w1[i].astype(matmul_dtype),
                    preferred_element_type=jnp.float32)
        h = jnp.maximum(t + b1[i], 0.0)
        t = jnp.dot(h.astype(matmul_dtype), w2[i].astype(matmul_dtype),
                    preferred_element_type=jnp.float32)
        h = jnp.maximum(t + b2[i], 0.0)
        h = h + res
    out = jnp.transpose(h.reshape(N, T, C, V, M), (0, 2, 1, 3, 4))
    return out.astype(x.dtype)


if __name__ == "__main__":
    # Small shapes consistent with the module: N=2 batches, C=3 channels,
    # T=8 frames, V=5 joints (num_point), M=2 persons (num_person) -> F=30.
    N, C, T, V, M = 2, 3, 8, 5, 2
    F = C * V * M

    key = jax.random.PRNGKey(0)
    kx, kw1, kb1, kw2, kb2 = jax.random.split(key, 5)

    x = jax.random.normal(kx, (N, C, T, V, M), dtype=jnp.float32)

    # Deterministic init matching nn.Linear's U(-1/sqrt(F), 1/sqrt(F)) scheme.
    # Weights are stored pre-transposed (in_features, out_features) so the
    # kernel computes y = x @ W + b directly on the MXU.
    bound = 1.0 / (F ** 0.5)
    w1 = jax.random.uniform(kw1, (NUM_BLOCKS, F, F), minval=-bound,
                            maxval=bound, dtype=jnp.float32)
    b1 = jax.random.uniform(kb1, (NUM_BLOCKS, F), minval=-bound,
                            maxval=bound, dtype=jnp.float32)
    w2 = jax.random.uniform(kw2, (NUM_BLOCKS, F, F), minval=-bound,
                            maxval=bound, dtype=jnp.float32)
    b2 = jax.random.uniform(kb2, (NUM_BLOCKS, F), minval=-bound,
                            maxval=bound, dtype=jnp.float32)

    # 1) Default fast path: bf16 MXU matmuls, f32 accumulation/elementwise.
    out_bf16 = jax.block_until_ready(anonymizer_forward(x, w1, b1, w2, b2))
    ref_bf16 = anonymizer_reference(x, w1, b1, w2, b2,
                                    matmul_dtype=jnp.bfloat16)
    assert out_bf16.shape == (N, C, T, V, M)
    assert jnp.allclose(out_bf16, ref_bf16, atol=1e-4, rtol=1e-4), \
        "bf16 kernel mismatch vs bf16 reference"

    # 2) Exact-parity path: f32 matmuls vs the f32 reference.
    out_f32 = jax.block_until_ready(
        anonymizer_forward(x, w1, b1, w2, b2, matmul_dtype=jnp.float32))
    ref_f32 = anonymizer_reference(x, w1, b1, w2, b2,
                                   matmul_dtype=jnp.float32)
    assert jnp.allclose(out_f32, ref_f32, atol=1e-4, rtol=1e-4), \
        "f32 parity kernel mismatch vs reference"

    # 3) Streamed-weights path (auto-selected for large F / tight VMEM);
    #    exercised explicitly here for coverage.
    out_stream = jax.block_until_ready(
        anonymizer_forward(x, w1, b1, w2, b2, matmul_dtype=jnp.bfloat16,
                           force_streamed=True))
    assert jnp.allclose(out_stream, ref_bf16, atol=1e-4, rtol=1e-4), \
        "streamed kernel mismatch vs bf16 reference"

    print("KERNEL_OK")
</pallas_src>

<mosaic_0001>
module attributes {stable_mosaic.version = 11 : i64} {
  func.func @_resident_kernel(%arg0: i32, %arg1: memref<8x128xf32, #tpu.memory_space<vmem>>, %arg2: memref<10x128x128xbf16, #tpu.memory_space<vmem>>, %arg3: memref<10x128xf32, #tpu.memory_space<vmem>>, %arg4: memref<10x128x128xbf16, #tpu.memory_space<vmem>>, %arg5: memref<10x128xf32, #tpu.memory_space<vmem>>, %arg6: memref<8x128xf32, #tpu.memory_space<vmem>>) attributes {dimension_semantics = [#tpu.dimension_semantics<parallel>], iteration_bounds = array<i64: 2>, scalar_prefetch = 0 : i64, scratch_operands = 0 : i64, tpu.core_type = #tpu.core_type<tc>, window_params = [{transform_indices = @transform_0, window_bounds = array<i64: 8, 128>}, {pipeline_mode = #tpu.pipeline_mode<synchronous>, transform_indices = @transform_1, window_bounds = array<i64: 10, 128, 128>}, {pipeline_mode = #tpu.pipeline_mode<synchronous>, transform_indices = @transform_2, window_bounds = array<i64: 10, 128>}, {pipeline_mode = #tpu.pipeline_mode<synchronous>, transform_indices = @transform_3, window_bounds = array<i64: 10, 128, 128>}, {pipeline_mode = #tpu.pipeline_mode<synchronous>, transform_indices = @transform_4, window_bounds = array<i64: 10, 128>}, {transform_indices = @transform_5, window_bounds = array<i64: 8, 128>}]} {
    %c0 = arith.constant 0 : index
    %c0_0 = arith.constant 0 : index
    %0 = vector.load %arg1[%c0, %c0_0] : memref<8x128xf32, #tpu.memory_space<vmem>>, vector<8x128xf32>
    %1 = arith.truncf %0 : vector<8x128xf32> to vector<8x128xbf16>
    %c0_1 = arith.constant 0 : index
    %c0_2 = arith.constant 0 : index
    %c0_3 = arith.constant 0 : index
    %2 = vector.load %arg2[%c0_1, %c0_2, %c0_3] : memref<10x128x128xbf16, #tpu.memory_space<vmem>>, vector<1x128x128xbf16>
    %3 = vector.shape_cast %2 : vector<1x128x128xbf16> to vector<128x128xbf16>
    %cst = arith.constant dense<0.000000e+00> : vector<8x128xf32>
    %4 = tpu.matmul %1, %3, %cst {dimension_numbers = #tpu.dot_dimension_numbers<[1], [0], [0], [1], [0, 0, 1, 1], [], []>} : vector<8x128xbf16>, vector<128x128xbf16>, vector<8x128xf32> -> vector<8x128xf32>
    %c0_4 = arith.constant 0 : index
    %c0_5 = arith.constant 0 : index
    %5 = vector.load %arg3[%c0_4, %c0_5] : memref<10x128xf32, #tpu.memory_space<vmem>>, vector<1x128xf32>
    %6 = vector.shape_cast %5 : vector<1x128xf32> to vector<128xf32>
    %7 = vector.shape_cast %6 : vector<128xf32> to vector<1x128xf32>
    %8 = vector.broadcast %7 : vector<1x128xf32> to vector<8x128xf32>
    %9 = arith.addf %4, %8 : vector<8x128xf32>
    %cst_6 = arith.constant 0.000000e+00 : f32
    %10 = vector.broadcast %cst_6 : f32 to vector<8x128xf32>
    %11 = arith.maximumf %9, %10 : vector<8x128xf32>
    %12 = arith.truncf %11 : vector<8x128xf32> to vector<8x128xbf16>
    %c0_7 = arith.constant 0 : index
    %c0_8 = arith.constant 0 : index
    %c0_9 = arith.constant 0 : index
    %13 = vector.load %arg4[%c0_7, %c0_8, %c0_9] : memref<10x128x128xbf16, #tpu.memory_space<vmem>>, vector<1x128x128xbf16>
    %14 = vector.shape_cast %13 : vector<1x128x128xbf16> to vector<128x128xbf16>
    %cst_10 = arith.constant dense<0.000000e+00> : vector<8x128xf32>
    %15 = tpu.matmul %12, %14, %cst_10 {dimension_numbers = #tpu.dot_dimension_numbers<[1], [0], [0], [1], [0, 0, 1, 1], [], []>} : vector<8x128xbf16>, vector<128x128xbf16>, vector<8x128xf32> -> vector<8x128xf32>
    %c0_11 = arith.constant 0 : index
    %c0_12 = arith.constant 0 : index
    %16 = vector.load %arg5[%c0_11, %c0_12] : memref<10x128xf32, #tpu.memory_space<vmem>>, vector<1x128xf32>
    %17 = vector.shape_cast %16 : vector<1x128xf32> to vector<128xf32>
    %18 = vector.shape_cast %17 : vector<128xf32> to vector<1x128xf32>
    %19 = vector.broadcast %18 : vector<1x128xf32> to vector<8x128xf32>
    %20 = arith.addf %15, %19 : vector<8x128xf32>
    %cst_13 = arith.constant 0.000000e+00 : f32
    %21 = vector.broadcast %cst_13 : f32 to vector<8x128xf32>
    %22 = arith.maximumf %20, %21 : vector<8x128xf32>
    %23 = arith.addf %22, %0 : vector<8x128xf32>
    %24 = arith.truncf %23 : vector<8x128xf32> to vector<8x128xbf16>
    %c1 = arith.constant 1 : index
    %c0_14 = arith.constant 0 : index
    %c0_15 = arith.constant 0 : index
    %25 = vector.load %arg2[%c1, %c0_14, %c0_15] : memref<10x128x128xbf16, #tpu.memory_space<vmem>>, vector<1x128x128xbf16>
    %26 = vector.shape_cast %25 : vector<1x128x128xbf16> to vector<128x128xbf16>
    %cst_16 = arith.constant dense<0.000000e+00> : vector<8x128xf32>
    %27 = tpu.matmul %24, %26, %cst_16 {dimension_numbers = #tpu.dot_dimension_numbers<[1], [0], [0], [1], [0, 0, 1, 1], [], []>} : vector<8x128xbf16>, vector<128x128xbf16>, vector<8x128xf32> -> vector<8x128xf32>
    %c1_17 = arith.constant 1 : index
    %c0_18 = arith.constant 0 : index
    %28 = vector.load %arg3[%c1_17, %c0_18] : memref<10x128xf32, #tpu.memory_space<vmem>>, vector<1x128xf32>
    %29 = vector.shape_cast %28 : vector<1x128xf32> to vector<128xf32>
    %30 = vector.shape_cast %29 : vector<128xf32> to vector<1x128xf32>
    %31 = vector.broadcast %30 : vector<1x128xf32> to vector<8x128xf32>
    %32 = arith.addf %27, %31 : vector<8x128xf32>
    %cst_19 = arith.constant 0.000000e+00 : f32
    %33 = vector.broadcast %cst_19 : f32 to vector<8x128xf32>
    %34 = arith.maximumf %32, %33 : vector<8x128xf32>
    %35 = arith.truncf %34 : vector<8x128xf32> to vector<8x128xbf16>
    %c1_20 = arith.constant 1 : index
    %c0_21 = arith.constant 0 : index
    %c0_22 = arith.constant 0 : index
    %36 = vector.load %arg4[%c1_20, %c0_21, %c0_22] : memref<10x128x128xbf16, #tpu.memory_space<vmem>>, vector<1x128x128xbf16>
    %37 = vector.shape_cast %36 : vector<1x128x128xbf16> to vector<128x128xbf16>
    %cst_23 = arith.constant dense<0.000000e+00> : vector<8x128xf32>
    %38 = tpu.matmul %35, %37, %cst_23 {dimension_numbers = #tpu.dot_dimension_numbers<[1], [0], [0], [1], [0, 0, 1, 1], [], []>} : vector<8x128xbf16>, vector<128x128xbf16>, vector<8x128xf32> -> vector<8x128xf32>
    %c1_24 = arith.constant 1 : index
    %c0_25 = arith.constant 0 : index
    %39 = vector.load %arg5[%c1_24, %c0_25] : memref<10x128xf32, #tpu.memory_space<vmem>>, vector<1x128xf32>
    %40 = vector.shape_cast %39 : vector<1x128xf32> to vector<128xf32>
    %41 = vector.shape_cast %40 : vector<128xf32> to vector<1x128xf32>
    %42 = vector.broadcast %41 : vector<1x128xf32> to vector<8x128xf32>
    %43 = arith.addf %38, %42 : vector<8x128xf32>
    %cst_26 = arith.constant 0.000000e+00 : f32
    %44 = vector.broadcast %cst_26 : f32 to vector<8x128xf32>
    %45 = arith.maximumf %43, %44 : vector<8x128xf32>
    %46 = arith.addf %45, %23 : vector<8x128xf32>
    %47 = arith.truncf %46 : vector<8x128xf32> to vector<8x128xbf16>
    %c2 = arith.constant 2 : index
    %c0_27 = arith.constant 0 : index
    %c0_28 = arith.constant 0 : index
    %48 = vector.load %arg2[%c2, %c0_27, %c0_28] : memref<10x128x128xbf16, #tpu.memory_space<vmem>>, vector<1x128x128xbf16>
    %49 = vector.shape_cast %48 : vector<1x128x128xbf16> to vector<128x128xbf16>
    %cst_29 = arith.constant dense<0.000000e+00> : vector<8x128xf32>
    %50 = tpu.matmul %47, %49, %cst_29 {dimension_numbers = #tpu.dot_dimension_numbers<[1], [0], [0], [1], [0, 0, 1, 1], [], []>} : vector<8x128xbf16>, vector<128x128xbf16>, vector<8x128xf32> -> vector<8x128xf32>
    %c2_30 = arith.constant 2 : index
    %c0_31 = arith.constant 0 : index
    %51 = vector.load %arg3[%c2_30, %c0_31] : memref<10x128xf32, #tpu.memory_space<vmem>>, vector<1x128xf32>
    %52 = vector.shape_cast %51 : vector<1x128xf32> to vector<128xf32>
    %53 = vector.shape_cast %52 : vector<128xf32> to vector<1x128xf32>
    %54 = vector.broadcast %53 : vector<1x128xf32> to vector<8x128xf32>
    %55 = arith.addf %50, %54 : vector<8x128xf32>
    %cst_32 = arith.constant 0.000000e+00 : f32
    %56 = vector.broadcast %cst_32 : f32 to vector<8x128xf32>
    %57 = arith.maximumf %55, %56 : vector<8x128xf32>
    %58 = arith.truncf %57 : vector<8x128xf32> to vector<8x128xbf16>
    %c2_33 = arith.constant 2 : index
    %c0_34 = arith.constant 0 : index
    %c0_35 = arith.constant 0 : index
    %59 = vector.load %arg4[%c2_33, %c0_34, %c0_35] : memref<10x128x128xbf16, #tpu.memory_space<vmem>>, vector<1x128x128xbf16>
    %60 = vector.shape_cast %59 : vector<1x128x128xbf16> to vector<128x128xbf16>
    %cst_36 = arith.constant dense<0.000000e+00> : vector<8x128xf32>
    %61 = tpu.matmul %58, %60, %cst_36 {dimension_numbers = #tpu.dot_dimension_numbers<[1], [0], [0], [1], [0, 0, 1, 1], [], []>} : vector<8x128xbf16>, vector<128x128xbf16>, vector<8x128xf32> -> vector<8x128xf32>
    %c2_37 = arith.constant 2 : index
    %c0_38 = arith.constant 0 : index
    %62 = vector.load %arg5[%c2_37, %c0_38] : memref<10x128xf32, #tpu.memory_space<vmem>>, vector<1x128xf32>
    %63 = vector.shape_cast %62 : vector<1x128xf32> to vector<128xf32>
    %64 = vector.shape_cast %63 : vector<128xf32> to vector<1x128xf32>
    %65 = vector.broadcast %64 : vector<1x128xf32> to vector<8x128xf32>
    %66 = arith.addf %61, %65 : vector<8x128xf32>
    %cst_39 = arith.constant 0.000000e+00 : f32
    %67 = vector.broadcast %cst_39 : f32 to vector<8x128xf32>
    %68 = arith.maximumf %66, %67 : vector<8x128xf32>
    %69 = arith.addf %68, %46 : vector<8x128xf32>
    %70 = arith.truncf %69 : vector<8x128xf32> to vector<8x128xbf16>
    %c3 = arith.constant 3 : index
    %c0_40 = arith.constant 0 : index
    %c0_41 = arith.constant 0 : index
    %71 = vector.load %arg2[%c3, %c0_40, %c0_41] : memref<10x128x128xbf16, #tpu.memory_space<vmem>>, vector<1x128x128xbf16>
    %72 = vector.shape_cast %71 : vector<1x128x128xbf16> to vector<128x128xbf16>
    %cst_42 = arith.constant dense<0.000000e+00> : vector<8x128xf32>
    %73 = tpu.matmul %70, %72, %cst_42 {dimension_numbers = #tpu.dot_dimension_numbers<[1], [0], [0], [1], [0, 0, 1, 1], [], []>} : vector<8x128xbf16>, vector<128x128xbf16>, vector<8x128xf32> -> vector<8x128xf32>
    %c3_43 = arith.constant 3 : index
    %c0_44 = arith.constant 0 : index
    %74 = vector.load %arg3[%c3_43, %c0_44] : memref<10x128xf32, #tpu.memory_space<vmem>>, vector<1x128xf32>
    %75 = vector.shape_cast %74 : vector<1x128xf32> to vector<128xf32>
    %76 = vector.shape_cast %75 : vector<128xf32> to vector<1x128xf32>
    %77 = vector.broadcast %76 : vector<1x128xf32> to vector<8x128xf32>
    %78 = arith.addf %73, %77 : vector<8x128xf32>
    %cst_45 = arith.constant 0.000000e+00 : f32
    %79 = vector.broadcast %cst_45 : f32 to vector<8x128xf32>
    %80 = arith.maximumf %78, %79 : vector<8x128xf32>
    %81 = arith.truncf %80 : vector<8x128xf32> to vector<8x128xbf16>
    %c3_46 = arith.constant 3 : index
    %c0_47 = arith.constant 0 : index
    %c0_48 = arith.constant 0 : index
    %82 = vector.load %arg4[%c3_46, %c0_47, %c0_48] : memref<10x128x128xbf16, #tpu.memory_space<vmem>>, vector<1x128x128xbf16>
    %83 = vector.shape_cast %82 : vector<1x128x128xbf16> to vector<128x128xbf16>
    %cst_49 = arith.constant dense<0.000000e+00> : vector<8x128xf32>
    %84 = tpu.matmul %81, %83, %cst_49 {dimension_numbers = #tpu.dot_dimension_numbers<[1], [0], [0], [1], [0, 0, 1, 1], [], []>} : vector<8x128xbf16>, vector<128x128xbf16>, vector<8x128xf32> -> vector<8x128xf32>
    %c3_50 = arith.constant 3 : index
    %c0_51 = arith.constant 0 : index
    %85 = vector.load %arg5[%c3_50, %c0_51] : memref<10x128xf32, #tpu.memory_space<vmem>>, vector<1x128xf32>
    %86 = vector.shape_cast %85 : vector<1x128xf32> to vector<128xf32>
    %87 = vector.shape_cast %86 : vector<128xf32> to vector<1x128xf32>
    %88 = vector.broadcast %87 : vector<1x128xf32> to vector<8x128xf32>
    %89 = arith.addf %84, %88 : vector<8x128xf32>
    %cst_52 = arith.constant 0.000000e+00 : f32
    %90 = vector.broadcast %cst_52 : f32 to vector<8x128xf32>
    %91 = arith.maximumf %89, %90 : vector<8x128xf32>
    %92 = arith.addf %91, %69 : vector<8x128xf32>
    %93 = arith.truncf %92 : vector<8x128xf32> to vector<8x128xbf16>
    %c4 = arith.constant 4 : index
    %c0_53 = arith.constant 0 : index
    %c0_54 = arith.constant 0 : index
    %94 = vector.load %arg2[%c4, %c0_53, %c0_54] : memref<10x128x128xbf16, #tpu.memory_space<vmem>>, vector<1x128x128xbf16>
    %95 = vector.shape_cast %94 : vector<1x128x128xbf16> to vector<128x128xbf16>
    %cst_55 = arith.constant dense<0.000000e+00> : vector<8x128xf32>
    %96 = tpu.matmul %93, %95, %cst_55 {dimension_numbers = #tpu.dot_dimension_numbers<[1], [0], [0], [1], [0, 0, 1, 1], [], []>} : vector<8x128xbf16>, vector<128x128xbf16>, vector<8x128xf32> -> vector<8x128xf32>
    %c4_56 = arith.constant 4 : index
    %c0_57 = arith.constant 0 : index
    %97 = vector.load %arg3[%c4_56, %c0_57] : memref<10x128xf32, #tpu.memory_space<vmem>>, vector<1x128xf32>
    %98 = vector.shape_cast %97 : vector<1x128xf32> to vector<128xf32>
    %99 = vector.shape_cast %98 : vector<128xf32> to vector<1x128xf32>
    %100 = vector.broadcast %99 : vector<1x128xf32> to vector<8x128xf32>
    %101 = arith.addf %96, %100 : vector<8x128xf32>
    %cst_58 = arith.constant 0.000000e+00 : f32
    %102 = vector.broadcast %cst_58 : f32 to vector<8x128xf32>
    %103 = arith.maximumf %101, %102 : vector<8x128xf32>
    %104 = arith.truncf %103 : vector<8x128xf32> to vector<8x128xbf16>
    %c4_59 = arith.constant 4 : index
    %c0_60 = arith.constant 0 : index
    %c0_61 = arith.constant 0 : index
    %105 = vector.load %arg4[%c4_59, %c0_60, %c0_61] : memref<10x128x128xbf16, #tpu.memory_space<vmem>>, vector<1x128x128xbf16>
    %106 = vector.shape_cast %105 : vector<1x128x128xbf16> to vector<128x128xbf16>
    %cst_62 = arith.constant dense<0.000000e+00> : vector<8x128xf32>
    %107 = tpu.matmul %104, %106, %cst_62 {dimension_numbers = #tpu.dot_dimension_numbers<[1], [0], [0], [1], [0, 0, 1, 1], [], []>} : vector<8x128xbf16>, vector<128x128xbf16>, vector<8x128xf32> -> vector<8x128xf32>
    %c4_63 = arith.constant 4 : index
    %c0_64 = arith.constant 0 : index
    %108 = vector.load %arg5[%c4_63, %c0_64] : memref<10x128xf32, #tpu.memory_space<vmem>>, vector<1x128xf32>
    %109 = vector.shape_cast %108 : vector<1x128xf32> to vector<128xf32>
    %110 = vector.shape_cast %109 : vector<128xf32> to vector<1x128xf32>
    %111 = vector.broadcast %110 : vector<1x128xf32> to vector<8x128xf32>
    %112 = arith.addf %107, %111 : vector<8x128xf32>
    %cst_65 = arith.constant 0.000000e+00 : f32
    %113 = vector.broadcast %cst_65 : f32 to vector<8x128xf32>
    %114 = arith.maximumf %112, %113 : vector<8x128xf32>
    %115 = arith.addf %114, %92 : vector<8x128xf32>
    %116 = arith.truncf %115 : vector<8x128xf32> to vector<8x128xbf16>
    %c5 = arith.constant 5 : index
    %c0_66 = arith.constant 0 : index
    %c0_67 = arith.constant 0 : index
    %117 = vector.load %arg2[%c5, %c0_66, %c0_67] : memref<10x128x128xbf16, #tpu.memory_space<vmem>>, vector<1x128x128xbf16>
    %118 = vector.shape_cast %117 : vector<1x128x128xbf16> to vector<128x128xbf16>
    %cst_68 = arith.constant dense<0.000000e+00> : vector<8x128xf32>
    %119 = tpu.matmul %116, %118, %cst_68 {dimension_numbers = #tpu.dot_dimension_numbers<[1], [0], [0], [1], [0, 0, 1, 1], [], []>} : vector<8x128xbf16>, vector<128x128xbf16>, vector<8x128xf32> -> vector<8x128xf32>
    %c5_69 = arith.constant 5 : index
    %c0_70 = arith.constant 0 : index
    %120 = vector.load %arg3[%c5_69, %c0_70] : memref<10x128xf32, #tpu.memory_space<vmem>>, vector<1x128xf32>
    %121 = vector.shape_cast %120 : vector<1x128xf32> to vector<128xf32>
    %122 = vector.shape_cast %121 : vector<128xf32> to vector<1x128xf32>
    %123 = vector.broadcast %122 : vector<1x128xf32> to vector<8x128xf32>
    %124 = arith.addf %119, %123 : vector<8x128xf32>
    %cst_71 = arith.constant 0.000000e+00 : f32
    %125 = vector.broadcast %cst_71 : f32 to vector<8x128xf32>
    %126 = arith.maximumf %124, %125 : vector<8x128xf32>
    %127 = arith.truncf %126 : vector<8x128xf32> to vector<8x128xbf16>
    %c5_72 = arith.constant 5 : index
    %c0_73 = arith.constant 0 : index
    %c0_74 = arith.constant 0 : index
    %128 = vector.load %arg4[%c5_72, %c0_73, %c0_74] : memref<10x128x128xbf16, #tpu.memory_space<vmem>>, vector<1x128x128xbf16>
    %129 = vector.shape_cast %128 : vector<1x128x128xbf16> to vector<128x128xbf16>
    %cst_75 = arith.constant dense<0.000000e+00> : vector<8x128xf32>
    %130 = tpu.matmul %127, %129, %cst_75 {dimension_numbers = #tpu.dot_dimension_numbers<[1], [0], [0], [1], [0, 0, 1, 1], [], []>} : vector<8x128xbf16>, vector<128x128xbf16>, vector<8x128xf32> -> vector<8x128xf32>
    %c5_76 = arith.constant 5 : index
    %c0_77 = arith.constant 0 : index
    %131 = vector.load %arg5[%c5_76, %c0_77] : memref<10x128xf32, #tpu.memory_space<vmem>>, vector<1x128xf32>
    %132 = vector.shape_cast %131 : vector<1x128xf32> to vector<128xf32>
    %133 = vector.shape_cast %132 : vector<128xf32> to vector<1x128xf32>
    %134 = vector.broadcast %133 : vector<1x128xf32> to vector<8x128xf32>
    %135 = arith.addf %130, %134 : vector<8x128xf32>
    %cst_78 = arith.constant 0.000000e+00 : f32
    %136 = vector.broadcast %cst_78 : f32 to vector<8x128xf32>
    %137 = arith.maximumf %135, %136 : vector<8x128xf32>
    %138 = arith.addf %137, %115 : vector<8x128xf32>
    %139 = arith.truncf %138 : vector<8x128xf32> to vector<8x128xbf16>
    %c6 = arith.constant 6 : index
    %c0_79 = arith.constant 0 : index
    %c0_80 = arith.constant 0 : index
    %140 = vector.load %arg2[%c6, %c0_79, %c0_80] : memref<10x128x128xbf16, #tpu.memory_space<vmem>>, vector<1x128x128xbf16>
    %141 = vector.shape_cast %140 : vector<1x128x128xbf16> to vector<128x128xbf16>
    %cst_81 = arith.constant dense<0.000000e+00> : vector<8x128xf32>
    %142 = tpu.matmul %139, %141, %cst_81 {dimension_numbers = #tpu.dot_dimension_numbers<[1], [0], [0], [1], [0, 0, 1, 1], [], []>} : vector<8x128xbf16>, vector<128x128xbf16>, vector<8x128xf32> -> vector<8x128xf32>
    %c6_82 = arith.constant 6 : index
    %c0_83 = arith.constant 0 : index
    %143 = vector.load %arg3[%c6_82, %c0_83] : memref<10x128xf32, #tpu.memory_space<vmem>>, vector<1x128xf32>
    %144 = vector.shape_cast %143 : vector<1x128xf32> to vector<128xf32>
    %145 = vector.shape_cast %144 : vector<128xf32> to vector<1x128xf32>
    %146 = vector.broadcast %145 : vector<1x128xf32> to vector<8x128xf32>
    %147 = arith.addf %142, %146 : vector<8x128xf32>
    %cst_84 = arith.constant 0.000000e+00 : f32
    %148 = vector.broadcast %cst_84 : f32 to vector<8x128xf32>
    %149 = arith.maximumf %147, %148 : vector<8x128xf32>
    %150 = arith.truncf %149 : vector<8x128xf32> to vector<8x128xbf16>
    %c6_85 = arith.constant 6 : index
    %c0_86 = arith.constant 0 : index
    %c0_87 = arith.constant 0 : index
    %151 = vector.load %arg4[%c6_85, %c0_86, %c0_87] : memref<10x128x128xbf16, #tpu.memory_space<vmem>>, vector<1x128x128xbf16>
    %152 = vector.shape_cast %151 : vector<1x128x128xbf16> to vector<128x128xbf16>
    %cst_88 = arith.constant dense<0.000000e+00> : vector<8x128xf32>
    %153 = tpu.matmul %150, %152, %cst_88 {dimension_numbers = #tpu.dot_dimension_numbers<[1], [0], [0], [1], [0, 0, 1, 1], [], []>} : vector<8x128xbf16>, vector<128x128xbf16>, vector<8x128xf32> -> vector<8x128xf32>
    %c6_89 = arith.constant 6 : index
    %c0_90 = arith.constant 0 : index
    %154 = vector.load %arg5[%c6_89, %c0_90] : memref<10x128xf32, #tpu.memory_space<vmem>>, vector<1x128xf32>
    %155 = vector.shape_cast %154 : vector<1x128xf32> to vector<128xf32>
    %156 = vector.shape_cast %155 : vector<128xf32> to vector<1x128xf32>
    %157 = vector.broadcast %156 : vector<1x128xf32> to vector<8x128xf32>
    %158 = arith.addf %153, %157 : vector<8x128xf32>
    %cst_91 = arith.constant 0.000000e+00 : f32
    %159 = vector.broadcast %cst_91 : f32 to vector<8x128xf32>
    %160 = arith.maximumf %158, %159 : vector<8x128xf32>
    %161 = arith.addf %160, %138 : vector<8x128xf32>
    %162 = arith.truncf %161 : vector<8x128xf32> to vector<8x128xbf16>
    %c7 = arith.constant 7 : index
    %c0_92 = arith.constant 0 : index
    %c0_93 = arith.constant 0 : index
    %163 = vector.load %arg2[%c7, %c0_92, %c0_93] : memref<10x128x128xbf16, #tpu.memory_space<vmem>>, vector<1x128x128xbf16>
    %164 = vector.shape_cast %163 : vector<1x128x128xbf16> to vector<128x128xbf16>
    %cst_94 = arith.constant dense<0.000000e+00> : vector<8x128xf32>
    %165 = tpu.matmul %162, %164, %cst_94 {dimension_numbers = #tpu.dot_dimension_numbers<[1], [0], [0], [1], [0, 0, 1, 1], [], []>} : vector<8x128xbf16>, vector<128x128xbf16>, vector<8x128xf32> -> vector<8x128xf32>
    %c7_95 = arith.constant 7 : index
    %c0_96 = arith.constant 0 : index
    %166 = vector.load %arg3[%c7_95, %c0_96] : memref<10x128xf32, #tpu.memory_space<vmem>>, vector<1x128xf32>
    %167 = vector.shape_cast %166 : vector<1x128xf32> to vector<128xf32>
    %168 = vector.shape_cast %167 : vector<128xf32> to vector<1x128xf32>
    %169 = vector.broadcast %168 : vector<1x128xf32> to vector<8x128xf32>
    %170 = arith.addf %165, %169 : vector<8x128xf32>
    %cst_97 = arith.constant 0.000000e+00 : f32
    %171 = vector.broadcast %cst_97 : f32 to vector<8x128xf32>
    %172 = arith.maximumf %170, %171 : vector<8x128xf32>
    %173 = arith.truncf %172 : vector<8x128xf32> to vector<8x128xbf16>
    %c7_98 = arith.constant 7 : index
    %c0_99 = arith.constant 0 : index
    %c0_100 = arith.constant 0 : index
    %174 = vector.load %arg4[%c7_98, %c0_99, %c0_100] : memref<10x128x128xbf16, #tpu.memory_space<vmem>>, vector<1x128x128xbf16>
    %175 = vector.shape_cast %174 : vector<1x128x128xbf16> to vector<128x128xbf16>
    %cst_101 = arith.constant dense<0.000000e+00> : vector<8x128xf32>
    %176 = tpu.matmul %173, %175, %cst_101 {dimension_numbers = #tpu.dot_dimension_numbers<[1], [0], [0], [1], [0, 0, 1, 1], [], []>} : vector<8x128xbf16>, vector<128x128xbf16>, vector<8x128xf32> -> vector<8x128xf32>
    %c7_102 = arith.constant 7 : index
    %c0_103 = arith.constant 0 : index
    %177 = vector.load %arg5[%c7_102, %c0_103] : memref<10x128xf32, #tpu.memory_space<vmem>>, vector<1x128xf32>
    %178 = vector.shape_cast %177 : vector<1x128xf32> to vector<128xf32>
    %179 = vector.shape_cast %178 : vector<128xf32> to vector<1x128xf32>
    %180 = vector.broadcast %179 : vector<1x128xf32> to vector<8x128xf32>
    %181 = arith.addf %176, %180 : vector<8x128xf32>
    %cst_104 = arith.constant 0.000000e+00 : f32
    %182 = vector.broadcast %cst_104 : f32 to vector<8x128xf32>
    %183 = arith.maximumf %181, %182 : vector<8x128xf32>
    %184 = arith.addf %183, %161 : vector<8x128xf32>
    %185 = arith.truncf %184 : vector<8x128xf32> to vector<8x128xbf16>
    %c8 = arith.constant 8 : index
    %c0_105 = arith.constant 0 : index
    %c0_106 = arith.constant 0 : index
    %186 = vector.load %arg2[%c8, %c0_105, %c0_106] : memref<10x128x128xbf16, #tpu.memory_space<vmem>>, vector<1x128x128xbf16>
    %187 = vector.shape_cast %186 : vector<1x128x128xbf16> to vector<128x128xbf16>
    %cst_107 = arith.constant dense<0.000000e+00> : vector<8x128xf32>
    %188 = tpu.matmul %185, %187, %cst_107 {dimension_numbers = #tpu.dot_dimension_numbers<[1], [0], [0], [1], [0, 0, 1, 1], [], []>} : vector<8x128xbf16>, vector<128x128xbf16>, vector<8x128xf32> -> vector<8x128xf32>
    %c8_108 = arith.constant 8 : index
    %c0_109 = arith.constant 0 : index
    %189 = vector.load %arg3[%c8_108, %c0_109] : memref<10x128xf32, #tpu.memory_space<vmem>>, vector<1x128xf32>
    %190 = vector.shape_cast %189 : vector<1x128xf32> to vector<128xf32>
    %191 = vector.shape_cast %190 : vector<128xf32> to vector<1x128xf32>
    %192 = vector.broadcast %191 : vector<1x128xf32> to vector<8x128xf32>
    %193 = arith.addf %188, %192 : vector<8x128xf32>
    %cst_110 = arith.constant 0.000000e+00 : f32
    %194 = vector.broadcast %cst_110 : f32 to vector<8x128xf32>
    %195 = arith.maximumf %193, %194 : vector<8x128xf32>
    %196 = arith.truncf %195 : vector<8x128xf32> to vector<8x128xbf16>
    %c8_111 = arith.constant 8 : index
    %c0_112 = arith.constant 0 : index
    %c0_113 = arith.constant 0 : index
    %197 = vector.load %arg4[%c8_111, %c0_112, %c0_113] : memref<10x128x128xbf16, #tpu.memory_space<vmem>>, vector<1x128x128xbf16>
    %198 = vector.shape_cast %197 : vector<1x128x128xbf16> to vector<128x128xbf16>
    %cst_114 = arith.constant dense<0.000000e+00> : vector<8x128xf32>
    %199 = tpu.matmul %196, %198, %cst_114 {dimension_numbers = #tpu.dot_dimension_numbers<[1], [0], [0], [1], [0, 0, 1, 1], [], []>} : vector<8x128xbf16>, vector<128x128xbf16>, vector<8x128xf32> -> vector<8x128xf32>
    %c8_115 = arith.constant 8 : index
    %c0_116 = arith.constant 0 : index
    %200 = vector.load %arg5[%c8_115, %c0_116] : memref<10x128xf32, #tpu.memory_space<vmem>>, vector<1x128xf32>
    %201 = vector.shape_cast %200 : vector<1x128xf32> to vector<128xf32>
    %202 = vector.shape_cast %201 : vector<128xf32> to vector<1x128xf32>
    %203 = vector.broadcast %202 : vector<1x128xf32> to vector<8x128xf32>
    %204 = arith.addf %199, %203 : vector<8x128xf32>
    %cst_117 = arith.constant 0.000000e+00 : f32
    %205 = vector.broadcast %cst_117 : f32 to vector<8x128xf32>
    %206 = arith.maximumf %204, %205 : vector<8x128xf32>
    %207 = arith.addf %206, %184 : vector<8x128xf32>
    %208 = arith.truncf %207 : vector<8x128xf32> to vector<8x128xbf16>
    %c9 = arith.constant 9 : index
    %c0_118 = arith.constant 0 : index
    %c0_119 = arith.constant 0 : index
    %209 = vector.load %arg2[%c9, %c0_118, %c0_119] : memref<10x128x128xbf16, #tpu.memory_space<vmem>>, vector<1x128x128xbf16>
    %210 = vector.shape_cast %209 : vector<1x128x128xbf16> to vector<128x128xbf16>
    %cst_120 = arith.constant dense<0.000000e+00> : vector<8x128xf32>
    %211 = tpu.matmul %208, %210, %cst_120 {dimension_numbers = #tpu.dot_dimension_numbers<[1], [0], [0], [1], [0, 0, 1, 1], [], []>} : vector<8x128xbf16>, vector<128x128xbf16>, vector<8x128xf32> -> vector<8x128xf32>
    %c9_121 = arith.constant 9 : index
    %c0_122 = arith.constant 0 : index
    %212 = vector.load %arg3[%c9_121, %c0_122] : memref<10x128xf32, #tpu.memory_space<vmem>>, vector<1x128xf32>
    %213 = vector.shape_cast %212 : vector<1x128xf32> to vector<128xf32>
    %214 = vector.shape_cast %213 : vector<128xf32> to vector<1x128xf32>
    %215 = vector.broadcast %214 : vector<1x128xf32> to vector<8x128xf32>
    %216 = arith.addf %211, %215 : vector<8x128xf32>
    %cst_123 = arith.constant 0.000000e+00 : f32
    %217 = vector.broadcast %cst_123 : f32 to vector<8x128xf32>
    %218 = arith.maximumf %216, %217 : vector<8x128xf32>
    %219 = arith.truncf %218 : vector<8x128xf32> to vector<8x128xbf16>
    %c9_124 = arith.constant 9 : index
    %c0_125 = arith.constant 0 : index
    %c0_126 = arith.constant 0 : index
    %220 = vector.load %arg4[%c9_124, %c0_125, %c0_126] : memref<10x128x128xbf16, #tpu.memory_space<vmem>>, vector<1x128x128xbf16>
    %221 = vector.shape_cast %220 : vector<1x128x128xbf16> to vector<128x128xbf16>
    %cst_127 = arith.constant dense<0.000000e+00> : vector<8x128xf32>
    %222 = tpu.matmul %219, %221, %cst_127 {dimension_numbers = #tpu.dot_dimension_numbers<[1], [0], [0], [1], [0, 0, 1, 1], [], []>} : vector<8x128xbf16>, vector<128x128xbf16>, vector<8x128xf32> -> vector<8x128xf32>
    %c9_128 = arith.constant 9 : index
    %c0_129 = arith.constant 0 : index
    %223 = vector.load %arg5[%c9_128, %c0_129] : memref<10x128xf32, #tpu.memory_space<vmem>>, vector<1x128xf32>
    %224 = vector.shape_cast %223 : vector<1x128xf32> to vector<128xf32>
    %225 = vector.shape_cast %224 : vector<128xf32> to vector<1x128xf32>
    %226 = vector.broadcast %225 : vector<1x128xf32> to vector<8x128xf32>
    %227 = arith.addf %222, %226 : vector<8x128xf32>
    %cst_130 = arith.constant 0.000000e+00 : f32
    %228 = vector.broadcast %cst_130 : f32 to vector<8x128xf32>
    %229 = arith.maximumf %227, %228 : vector<8x128xf32>
    %230 = arith.addf %229, %207 : vector<8x128xf32>
    %c0_131 = arith.constant 0 : index
    %c0_132 = arith.constant 0 : index
    %231 = vector.load %arg6[%c0_131, %c0_132] : memref<8x128xf32, #tpu.memory_space<vmem>>, vector<8x128xf32>
    tpu.vector_store %arg6[%c0_131, %c0_132], %230 {strides = array<i32>} : memref<8x128xf32, #tpu.memory_space<vmem>>, vector<8x128xf32>,
    return
  }
  func.func @transform_0(%arg0: i32) -> (i32, i32) {
    %c0_i32 = arith.constant 0 : i32
    %c0_i32_0 = arith.constant 0 : i32
    return %arg0, %c0_i32 : i32, i32
  }
  func.func @transform_1(%arg0: i32) -> (i32, i32, i32) {
    %c0_i32 = arith.constant 0 : i32
    %c0_i32_0 = arith.constant 0 : i32
    %c0_i32_1 = arith.constant 0 : i32
    %c0_i32_2 = arith.constant 0 : i32
    return %c0_i32, %c0_i32_0, %c0_i32_1 : i32, i32, i32
  }
  func.func @transform_2(%arg0: i32) -> (i32, i32) {
    %c0_i32 = arith.constant 0 : i32
    %c0_i32_0 = arith.constant 0 : i32
    %c0_i32_1 = arith.constant 0 : i32
    return %c0_i32, %c0_i32_0 : i32, i32
  }
  func.func @transform_3(%arg0: i32) -> (i32, i32, i32) {
    %c0_i32 = arith.constant 0 : i32
    %c0_i32_0 = arith.constant 0 : i32
    %c0_i32_1 = arith.constant 0 : i32
    %c0_i32_2 = arith.constant 0 : i32
    return %c0_i32, %c0_i32_0, %c0_i32_1 : i32, i32, i32
  }
  func.func @transform_4(%arg0: i32) -> (i32, i32) {
    %c0_i32 = arith.constant 0 : i32
    %c0_i32_0 = arith.constant 0 : i32
    %c0_i32_1 = arith.constant 0 : i32
    return %c0_i32, %c0_i32_0 : i32, i32
  }
  func.func @transform_5(%arg0: i32) -> (i32, i32) {
    %c0_i32 = arith.constant 0 : i32
    %c0_i32_0 = arith.constant 0 : i32
    return %arg0, %c0_i32 : i32, i32
  }
}

</mosaic_0001>

<llo_original>
// kernel: tpu_custom_call.1
$region0: #{tpu_custom_call.1}
  #allocation0 [shape = 'u32[]', space=smem, size = 0x4, offset = 0x4, fixed_abs, tag = 'smem constant byte address 0x4 - core index']
  #allocation1 [shape = 'u32[72,128]{1,0:T(1,128)}', space=vmem, size = 0x9000, scoped, tag = 'internal scratch']
  %s0 = inlined_call_operand.hbm [shape: f32[16,128], index: 0, kind: input, shape index: {}]
  %s1 = inlined_call_operand.hbm [shape: bf16[10,128,128], index: 1, kind: input, shape index: {}]
  %s2 = inlined_call_operand.hbm [shape: f32[10,128], index: 2, kind: input, shape index: {}]
  %s3 = inlined_call_operand.hbm [shape: bf16[10,128,128], index: 3, kind: input, shape index: {}]
  %s4 = inlined_call_operand.hbm [shape: f32[10,128], index: 4, kind: input, shape index: {}]
  %s5 = inlined_call_operand.hbm [shape: f32[16,128], index: 5, kind: output, shape index: {}]
  %s6 = sld [smem:[#allocation0]]
  $region73: #{tpu_custom_call.1} parent=0
    _
  %s8 = ssub.s32 1, %s6
  %s9 = scalar_select 0, %s8, %s6
  $region1: #{tpu_custom_call.1} parent=0
    #allocation2 [shape = 'u8[8192]{0}', space=vmem, size = 0x2000, scoped, tag = 'input window, operand 0']
    #allocation3 [shape = 's32[2]{0}', space=sflag, size = 0x8, scoped, tag = 'scoped memory for tpu_custom_call.1']
    #allocation4 [shape = 's32[2]{0}', space=sflag, size = 0x8, scoped, tag = 'scoped memory for tpu_custom_call.1']
    #allocation5 [shape = 'u8[327680]{0}', space=vmem, size = 0x50000, scoped, tag = 'input window, operand 1, single buffered']
    #allocation6 [shape = 's32[1]{0}', space=sflag, size = 0x4, scoped, tag = 'scoped memory for tpu_custom_call.1']
    #allocation7 [shape = 'u8[8192]{0}', space=vmem, size = 0x2000, scoped, tag = 'input window, operand 2, single buffered']
    #allocation8 [shape = 'u8[327680]{0}', space=vmem, size = 0x50000, scoped, tag = 'input window, operand 3, single buffered']
    #allocation9 [shape = 's32[1]{0}', space=sflag, size = 0x4, scoped, tag = 'scoped memory for tpu_custom_call.1']
    #allocation10 [shape = 'u8[8192]{0}', space=vmem, size = 0x2000, scoped, tag = 'input window, operand 4, single buffered']
    #allocation11 [shape = 'u8[8192]{0}', space=vmem, size = 0x2000, scoped, tag = 'output window, operand 0']
    %10 = vsyncpa [#allocation3], 0
    %s11 = scalar_lea.sflag [#allocation3], 1
    %12 = vsyncpa %s11, 0
    %13 = vsyncpa [#allocation6], 0
    %14 = vsyncpa [#allocation9], 0
    %15 = vsyncpa [#allocation4], 0
    %s16 = scalar_lea.sflag [#allocation4], 1
    %17 = vsyncpa %s16, 0
    loop: start=0, step=1, limit=4
    $region2: #{tpu_custom_call.1} parent=1 // loop_pre_header
      _
    $region3: #{tpu_custom_call.1} parent=1 // loop_header
      %s19 = sphi 0, %s23
      %p20 = scmp.ge.s32.totalorder %s19, 4
      %s29 = sphi 0, %s31
      %s32 = sphi 0, %s29
      %s33 = sphi 0, %s32
      %s49 = sphi 0, %s33
      %s53 = sphi 0, %s53
      %s55 = sphi 0, %s53
      %s56 = sphi 0, %s55
      %s70 = sphi 0, %s56
      %s74 = sphi 0, %s74
      %s76 = sphi 0, %s74
      %s77 = sphi 0, %s76
      %s91 = sphi 0, %s77
      %s95 = sphi 0, %s95
      %s97 = sphi 0, %s95
      %s98 = sphi 0, %s97
      %s112 = sphi 0, %s98
      %s116 = sphi 0, %s116
      %s118 = sphi 0, %s116
      %s119 = sphi 0, %s118
      %s133 = sphi 0, %s119
      %s139 = sphi 0, %s141
      %s142 = sphi 0, %s139
      %s143 = sphi 0, %s142
      %s159 = sphi 0, %s143
    $region4: #{tpu_custom_call.1} parent=1 // loop_header_branch
      %22 = sbr.rel (%p20) target = $region8
    $region5: #{tpu_custom_call.1} parent=1 // loop_body
      %s24 = ssub.s32 %s19, 1
      %s25 = ssub.s32 %s19, 2
      %s26 = sadd.s32 %s19, 1
      %s27 = ssub.s32 %s19, %s26
      %p28 = scmp.eq.s32.totalorder %s27, 0
      %s30 = sadd.s32 %s29, 1
      %s31 = scalar_select %p28, %s29, %s30
      %p34 = pneg %p28
      %p35 = scmp.eq.s32.totalorder %s19, 1
      %p36 = por %p34, %p35
      %p37 = scmp.ne.s32.totalorder %s29, %s32
      %p38 = scmp.eq.s32.totalorder %s19, 0
      %p39 = por %p37, %p38
      %p40 = scmp.ne.s32.totalorder %s29, %s32
      %p41 = scmp.eq.s32.totalorder %s24, 1
      %p42 = por %p40, %p41
      %p43 = scmp.ne.s32.totalorder %s32, %s33
      %p44 = scmp.eq.s32.totalorder %s24, 0
      %p45 = por %p43, %p44
      %p46 = scmp.ne.s32.totalorder %s32, %s33
      %p47 = scmp.eq.s32.totalorder %s25, 1
      %p48 = por %p46, %p47
      %p50 = scmp.ne.s32.totalorder %s33, %s49
      %p51 = scmp.eq.s32.totalorder %s25, 0
      %p52 = por %p50, %p51
      %s54 = sadd.s32 %s53, 1
      %p57 = scmp.eq.s32.totalorder %s19, 1
      %p58 = scmp.ne.s32.totalorder %s53, %s55
      %p59 = scmp.eq.s32.totalorder %s19, 0
      %p60 = por %p58, %p59
      %p61 = scmp.ne.s32.totalorder %s53, %s55
      %p62 = scmp.eq.s32.totalorder %s24, 1
      %p63 = por %p61, %p62
      %p64 = scmp.ne.s32.totalorder %s55, %s56
      %p65 = scmp.eq.s32.totalorder %s24, 0
      %p66 = por %p64, %p65
      %p67 = scmp.ne.s32.totalorder %s55, %s56
      %p68 = scmp.eq.s32.totalorder %s25, 1
      %p69 = por %p67, %p68
      %p71 = scmp.ne.s32.totalorder %s56, %s70
      %p72 = scmp.eq.s32.totalorder %s25, 0
      %p73 = por %p71, %p72
      %s75 = sadd.s32 %s74, 1
      %p78 = scmp.eq.s32.totalorder %s19, 1
      %p79 = scmp.ne.s32.totalorder %s74, %s76
      %p80 = scmp.eq.s32.totalorder %s19, 0
      %p81 = por %p79, %p80
      %p82 = scmp.ne.s32.totalorder %s74, %s76
      %p83 = scmp.eq.s32.totalorder %s24, 1
      %p84 = por %p82, %p83
      %p85 = scmp.ne.s32.totalorder %s76, %s77
      %p86 = scmp.eq.s32.totalorder %s24, 0
      %p87 = por %p85, %p86
      %p88 = scmp.ne.s32.totalorder %s76, %s77
      %p89 = scmp.eq.s32.totalorder %s25, 1
      %p90 = por %p88, %p89
      %p92 = scmp.ne.s32.totalorder %s77, %s91
      %p93 = scmp.eq.s32.totalorder %s25, 0
      %p94 = por %p92, %p93
      %s96 = sadd.s32 %s95, 1
      %p99 = scmp.eq.s32.totalorder %s19, 1
      %p100 = scmp.ne.s32.totalorder %s95, %s97
      %p101 = scmp.eq.s32.totalorder %s19, 0
      %p102 = por %p100, %p101
      %p103 = scmp.ne.s32.totalorder %s95, %s97
      %p104 = scmp.eq.s32.totalorder %s24, 1
      %p105 = por %p103, %p104
      %p106 = scmp.ne.s32.totalorder %s97, %s98
      %p107 = scmp.eq.s32.totalorder %s24, 0
      %p108 = por %p106, %p107
      %p109 = scmp.ne.s32.totalorder %s97, %s98
      %p110 = scmp.eq.s32.totalorder %s25, 1
      %p111 = por %p109, %p110
      %p113 = scmp.ne.s32.totalorder %s98, %s112
      %p114 = scmp.eq.s32.totalorder %s25, 0
      %p115 = por %p113, %p114
      %s117 = sadd.s32 %s116, 1
      %p120 = scmp.eq.s32.totalorder %s19, 1
      %p121 = scmp.ne.s32.totalorder %s116, %s118
      %p122 = scmp.eq.s32.totalorder %s19, 0
      %p123 = por %p121, %p122
      %p124 = scmp.ne.s32.totalorder %s116, %s118
      %p125 = scmp.eq.s32.totalorder %s24, 1
      %p126 = por %p124, %p125
      %p127 = scmp.ne.s32.totalorder %s118, %s119
      %p128 = scmp.eq.s32.totalorder %s24, 0
      %p129 = por %p127, %p128
      %p130 = scmp.ne.s32.totalorder %s118, %s119
      %p131 = scmp.eq.s32.totalorder %s25, 1
      %p132 = por %p130, %p131
      %p134 = scmp.ne.s32.totalorder %s119, %s133
      %p135 = scmp.eq.s32.totalorder %s25, 0
      %p136 = por %p134, %p135
      %s137 = ssub.s32 %s19, %s26
      %p138 = scmp.eq.s32.totalorder %s137, 0
      %s140 = sadd.s32 %s139, 1
      %s141 = scalar_select %p138, %s139, %s140
      %p144 = pneg %p138
      %p145 = scmp.eq.s32.totalorder %s19, 1
      %p146 = por %p144, %p145
      %p147 = scmp.ne.s32.totalorder %s139, %s142
      %p148 = scmp.eq.s32.totalorder %s19, 0
      %p149 = por %p147, %p148
      %p150 = scmp.ne.s32.totalorder %s139, %s142
      %p151 = scmp.eq.s32.totalorder %s24, 1
      %p152 = por %p150, %p151
      %p153 = scmp.ne.s32.totalorder %s142, %s143
      %p154 = scmp.eq.s32.totalorder %s24, 0
      %p155 = por %p153, %p154
      %p156 = scmp.ne.s32.totalorder %s142, %s143
      %p157 = scmp.eq.s32.totalorder %s25, 1
      %p158 = por %p156, %p157
      %p160 = scmp.ne.s32.totalorder %s143, %s159
      %p161 = scmp.eq.s32.totalorder %s25, 0
      %p162 = por %p160, %p161
      %p163 = scmp.le.s32.totalorder 1, %s19
      %p164 = scmp.lt.s32.totalorder %s19, 3
      %p165 = pnand %p163, %p164
      %p166 = pneg %p165
      // Predicated region
      $region9: #{tpu_custom_call.1} parent=5 // pred_check
        _
      $region10: #{tpu_custom_call.1} parent=5 // pred_check_branch
        %168 = sbr.rel (%p165) target = $region12
      $region11: #{tpu_custom_call.1} parent=5 // pred_region
        %s169 = ssub.s32 %s19, 1
        // Predicated region
        $region13: #{tpu_custom_call.1} parent=11 // pred_check
          %p170 = pneg %p66
        $region14: #{tpu_custom_call.1} parent=11 // pred_check_branch
          %172 = sbr.rel (%p170) target = $region16
        $region15: #{tpu_custom_call.1} parent=11 // pred_region
          %174 = vsyncadd [#allocation6], 0
          %s175 = sshll.u32 %s1, 4
          %s176 = int_to_ptr.hbm [resolvable:$true] %s175
          %s177 = sshll.u32 [#allocation5], 4
          %s178 = int_to_ptr.vmem [resolvable:$true] %s177
          %183 = dma.hbm_to_vmem [thread:$0]  %s176, 10240, %s178, [#allocation6], 64, 64, 4
        $region16: #{tpu_custom_call.1} parent=11 // pred_fallthru
          _
        // Predicated region
        $region17: #{tpu_custom_call.1} parent=11 // pred_check
          %p184 = pneg %p87
        $region18: #{tpu_custom_call.1} parent=11 // pred_check_branch
          %186 = sbr.rel (%p184) target = $region20
        $region19: #{tpu_custom_call.1} parent=11 // pred_region
          %188 = vsyncadd [#allocation6], 0
          %s189 = sshll.u32 %s2, 4
          %s190 = int_to_ptr.hbm [resolvable:$true] %s189
          %s191 = sshll.u32 [#allocation7], 4
          %s192 = int_to_ptr.vmem [resolvable:$true] %s191
          %197 = dma.hbm_to_vmem [thread:$0]  %s190, 256, %s192, [#allocation6], 128, 128, 8
        $region20: #{tpu_custom_call.1} parent=11 // pred_fallthru
          _
        // Predicated region
        $region21: #{tpu_custom_call.1} parent=11 // pred_check
          %p198 = pneg %p108
        $region22: #{tpu_custom_call.1} parent=11 // pred_check_branch
          %200 = sbr.rel (%p198) target = $region24
        $region23: #{tpu_custom_call.1} parent=11 // pred_region
          %202 = vsyncadd [#allocation9], 0
          %s203 = sshll.u32 %s3, 4
          %s204 = int_to_ptr.hbm [resolvable:$true] %s203
          %s205 = sshll.u32 [#allocation8], 4
          %s206 = int_to_ptr.vmem [resolvable:$true] %s205
          %211 = dma.hbm_to_vmem [thread:$0]  %s204, 10240, %s206, [#allocation9], 64, 64, 4
        $region24: #{tpu_custom_call.1} parent=11 // pred_fallthru
          _
        // Predicated region
        $region25: #{tpu_custom_call.1} parent=11 // pred_check
          %p212 = pneg %p129
        $region26: #{tpu_custom_call.1} parent=11 // pred_check_branch
          %214 = sbr.rel (%p212) target = $region28
        $region27: #{tpu_custom_call.1} parent=11 // pred_region
          %216 = vsyncadd [#allocation9], 0
          %s217 = sshll.u32 %s4, 4
          %s218 = int_to_ptr.hbm [resolvable:$true] %s217
          %s219 = sshll.u32 [#allocation10], 4
          %s220 = int_to_ptr.vmem [resolvable:$true] %s219
          %225 = dma.hbm_to_vmem [thread:$0]  %s218, 256, %s220, [#allocation9], 128, 128, 8
        $region28: #{tpu_custom_call.1} parent=11 // pred_fallthru
          _
      $region12: #{tpu_custom_call.1} parent=5 // pred_fallthru
        _
      %p226 = scmp.lt.s32.totalorder %s19, 2
      // Predicated region
      $region29: #{tpu_custom_call.1} parent=5 // pred_check
        %p227 = pneg %p226
      $region30: #{tpu_custom_call.1} parent=5 // pred_check_branch
        %229 = sbr.rel (%p227) target = $region32
      $region31: #{tpu_custom_call.1} parent=5 // pred_region
        // Predicated region
        $region33: #{tpu_custom_call.1} parent=31 // pred_check
          %p230 = pneg %p39
        $region34: #{tpu_custom_call.1} parent=31 // pred_check_branch
          %232 = sbr.rel (%p230) target = $region36
        $region35: #{tpu_custom_call.1} parent=31 // pred_region
          %s233 = sand.u32 %s29, 1
          %s234 = scalar_lea.sflag [#allocation3], %s233
          %s235 = sand.u32 %s29, 1
          %s236 = smul.addr %s235, 8
          %s237 = scalar_lea.vmem [#allocation2], %s236
          %239 = vsyncadd %s234, 0
          %s240 = smul.addr %s19, 8
          %s241 = scalar_lea.hbm %s0, %s240
          %s243 = sshll.u32 %s241, 4
          %s244 = int_to_ptr.hbm [resolvable:$true] %s243
          %s245 = sshll.u32 %s237, 4
          %s246 = int_to_ptr.vmem [resolvable:$true] %s245
          %248 = dma.hbm_to_vmem [thread:$0]  %s244, 128, %s246, %s234
        $region36: #{tpu_custom_call.1} parent=31 // pred_fallthru
          _
      $region32: #{tpu_custom_call.1} parent=5 // pred_fallthru
        _
      %p249 = scmp.le.s32.totalorder 1, %s19
      %p250 = scmp.lt.s32.totalorder %s19, 3
      %p251 = pnand %p249, %p250
      %p252 = pneg %p251
      // Predicated region
      $region37: #{tpu_custom_call.1} parent=5 // pred_check
        _
      $region38: #{tpu_custom_call.1} parent=5 // pred_check_branch
        %254 = sbr.rel (%p251) target = $region40
      $region39: #{tpu_custom_call.1} parent=5 // pred_region
        %s255 = ssub.s32 %s19, 1
        %s256 = sand.u32 %s32, 1
        %s257 = scalar_lea.sflag [#allocation3], %s256
        %s258 = sand.u32 %s32, 1
        %s259 = smul.addr %s258, 8
        %s260 = scalar_lea.vmem [#allocation2], %s259
        // Predicated region
        $region41: #{tpu_custom_call.1} parent=39 // pred_check
          %p261 = pneg %p45
        $region42: #{tpu_custom_call.1} parent=39 // pred_check_branch
          %263 = sbr.rel (%p261) target = $region44
        $region43: #{tpu_custom_call.1} parent=39 // pred_region
          %265 = dma.done %s257, 128
        $region44: #{tpu_custom_call.1} parent=39 // pred_fallthru
          _
        // Predicated region
        $region45: #{tpu_custom_call.1} parent=39 // pred_check
          %p266 = pneg %p66
        $region46: #{tpu_custom_call.1} parent=39 // pred_check_branch
          %268 = sbr.rel (%p266) target = $region48
        $region47: #{tpu_custom_call.1} parent=39 // pred_region
          %270 = dma.done [#allocation6], 10240
        $region48: #{tpu_custom_call.1} parent=39 // pred_fallthru
          _
        // Predicated region
        $region49: #{tpu_custom_call.1} parent=39 // pred_check
          %p271 = pneg %p87
        $region50: #{tpu_custom_call.1} parent=39 // pred_check_branch
          %273 = sbr.rel (%p271) target = $region52
        $region51: #{tpu_custom_call.1} parent=39 // pred_region
          %275 = dma.done [#allocation6], 256
        $region52: #{tpu_custom_call.1} parent=39 // pred_fallthru
          _
        // Predicated region
        $region53: #{tpu_custom_call.1} parent=39 // pred_check
          %p276 = pneg %p108
        $region54: #{tpu_custom_call.1} parent=39 // pred_check_branch
          %278 = sbr.rel (%p276) target = $region56
        $region55: #{tpu_custom_call.1} parent=39 // pred_region
          %280 = dma.done [#allocation9], 10240
        $region56: #{tpu_custom_call.1} parent=39 // pred_fallthru
          _
        // Predicated region
        $region57: #{tpu_custom_call.1} parent=39 // pred_check
          %p281 = pneg %p129
        $region58: #{tpu_custom_call.1} parent=39 // pred_check_branch
          %283 = sbr.rel (%p281) target = $region60
        $region59: #{tpu_custom_call.1} parent=39 // pred_region
          %285 = dma.done [#allocation9], 256
        $region60: #{tpu_custom_call.1} parent=39 // pred_fallthru
          _
        %s286 = sand.u32 %s32, 1
        %s287 = scalar_lea.sflag [#allocation3], %s286
        %s288 = sand.u32 %s32, 1
        %s289 = smul.addr %s288, 8
        %s290 = scalar_lea.vmem [#allocation2], %s289
        %p291 = pneg %p45
        %p292 = pneg %p42
        %p293 = pneg %p66
        %p294 = pneg %p63
        %p295 = pneg %p87
        %p296 = pneg %p84
        %p297 = pneg %p108
        %p298 = pneg %p105
        %p299 = pneg %p129
        %p300 = pneg %p126
        %p301 = pneg %p155
        %p302 = pneg %p152
        %s303 = sand.u32 %s142, 1
        %s304 = scalar_lea.sflag [#allocation4], %s303
        %s305 = sand.u32 %s142, 1
        %s306 = smul.addr %s305, 8
        %s307 = scalar_lea.vmem [#allocation11], %s306
        %v308 = vld [vmem:[%s260] sm:$0xff]
        %v309 = vpack.c.bf16 %v308, %v308
        %v310 = vld [vmem:[#allocation5] sm:$0xf]
        %v311 = vld [vmem:[#allocation5 + $0x4] sm:$0xf]
        %v312 = vld [vmem:[#allocation5 + $0x8] sm:$0xf]
        %v313 = vld [vmem:[#allocation5 + $0xc] sm:$0xf]
        %v314 = vld [vmem:[#allocation5 + $0x10] sm:$0xf]
        %v315 = vld [vmem:[#allocation5 + $0x14] sm:$0xf]
        %v316 = vld [vmem:[#allocation5 + $0x18] sm:$0xf]
        %v317 = vld [vmem:[#allocation5 + $0x1c] sm:$0xf]
        %v318 = vld [vmem:[#allocation5 + $0x20] sm:$0xf]
        %v319 = vld [vmem:[#allocation5 + $0x24] sm:$0xf]
        %v320 = vld [vmem:[#allocation5 + $0x28] sm:$0xf]
        %v321 = vld [vmem:[#allocation5 + $0x2c] sm:$0xf]
        %v322 = vld [vmem:[#allocation5 + $0x30] sm:$0xf]
        %v323 = vld [vmem:[#allocation5 + $0x34] sm:$0xf]
        %v324 = vld [vmem:[#allocation5 + $0x38] sm:$0xf]
        %v325 = vld [vmem:[#allocation5 + $0x3c] sm:$0xf]
        %v326 = vld [vmem:[#allocation7] sm:$0x1]
        %v327 = vperm.slane %v326, 0
        %v344 = vunpack.c.l.b16 %v310
        %v345 = vunpack.c.l.b16 %v311
        %v346 = vunpack.c.l.b16 %v312
        %v347 = vunpack.c.l.b16 %v313
        %v348 = vunpack.c.l.b16 %v314
        %v349 = vunpack.c.l.b16 %v315
        %v350 = vunpack.c.l.b16 %v316
        %v351 = vunpack.c.l.b16 %v317
        %v352 = vunpack.c.l.b16 %v318
        %v353 = vunpack.c.l.b16 %v319
        %v354 = vunpack.c.l.b16 %v320
        %v355 = vunpack.c.l.b16 %v321
        %v356 = vunpack.c.l.b16 %v322
        %v357 = vunpack.c.l.b16 %v323
        %v358 = vunpack.c.l.b16 %v324
        %v359 = vunpack.c.l.b16 %v325
        %v360 = vpack.c.b16 %v345, %v344
        %v361 = vpack.c.b16 %v347, %v346
        %v362 = vpack.c.b16 %v349, %v348
        %v363 = vpack.c.b16 %v351, %v350
        %v364 = vpack.c.b16 %v353, %v352
        %v365 = vpack.c.b16 %v355, %v354
        %v366 = vpack.c.b16 %v357, %v356
        %v367 = vpack.c.b16 %v359, %v358
        %376 = vmatpush.bf16.msra.mxu0 %v367
        %377 = vmatpush.bf16.msra.mxu0 %v366
        %378 = vmatpush.bf16.msra.mxu0 %v365
        %379 = vmatpush.bf16.msra.mxu0 %v364
        %380 = vmatpush.bf16.msra.mxu0 %v363
        %381 = vmatpush.bf16.msra.mxu0 %v362
        %382 = vmatpush.bf16.msra.mxu0 %v361
        %383 = vmatpush.bf16.msra.mxu0 %v360
        %384 = vmatmul.bf16.gmra.mxu0 %v309
        %v385 = vpop.f32.mrf.mxu0
        %v386 = vadd.f32 %v327, %v385
        %v387 = vpop.f32.mrf.mxu0
        %388 = vdwg.mxu0
        %v389 = vmax.f32 %v386, 0.0
        %v390 = vpack.c.bf16 %v389, %v389
        %v391 = vld [vmem:[#allocation8] sm:$0xf]
        %v392 = vld [vmem:[#allocation8 + $0x4] sm:$0xf]
        %v393 = vld [vmem:[#allocation8 + $0x8] sm:$0xf]
        %v394 = vld [vmem:[#allocation8 + $0xc] sm:$0xf]
        %v395 = vld [vmem:[#allocation8 + $0x10] sm:$0xf]
        %v396 = vld [vmem:[#allocation8 + $0x14] sm:$0xf]
        %v397 = vld [vmem:[#allocation8 + $0x18] sm:$0xf]
        %v398 = vld [vmem:[#allocation8 + $0x1c] sm:$0xf]
        %v399 = vld [vmem:[#allocation8 + $0x20] sm:$0xf]
        %v400 = vld [vmem:[#allocation8 + $0x24] sm:$0xf]
        %v401 = vld [vmem:[#allocation8 + $0x28] sm:$0xf]
        %v402 = vld [vmem:[#allocation8 + $0x2c] sm:$0xf]
        %v403 = vld [vmem:[#allocation8 + $0x30] sm:$0xf]
        %v404 = vld [vmem:[#allocation8 + $0x34] sm:$0xf]
        %v405 = vld [vmem:[#allocation8 + $0x38] sm:$0xf]
        %v406 = vld [vmem:[#allocation8 + $0x3c] sm:$0xf]
        %v407 = vld [vmem:[#allocation10] sm:$0x1]
        %v408 = vperm.slane %v407, 0
        %v425 = vunpack.c.l.b16 %v391
        %v426 = vunpack.c.l.b16 %v392
        %v427 = vunpack.c.l.b16 %v393
        %v428 = vunpack.c.l.b16 %v394
        %v429 = vunpack.c.l.b16 %v395
        %v430 = vunpack.c.l.b16 %v396
        %v431 = vunpack.c.l.b16 %v397
        %v432 = vunpack.c.l.b16 %v398
        %v433 = vunpack.c.l.b16 %v399
        %v434 = vunpack.c.l.b16 %v400
        %v435 = vunpack.c.l.b16 %v401
        %v436 = vunpack.c.l.b16 %v402
        %v437 = vunpack.c.l.b16 %v403
        %v438 = vunpack.c.l.b16 %v404
        %v439 = vunpack.c.l.b16 %v405
        %v440 = vunpack.c.l.b16 %v406
        %v441 = vpack.c.b16 %v426, %v425
        %v442 = vpack.c.b16 %v428, %v427
        %v443 = vpack.c.b16 %v430, %v429
        %v444 = vpack.c.b16 %v432, %v431
        %v445 = vpack.c.b16 %v434, %v433
        %v446 = vpack.c.b16 %v436, %v435
        %v447 = vpack.c.b16 %v438, %v437
        %v448 = vpack.c.b16 %v440, %v439
        %457 = vmatpush.bf16.msra.mxu0 %v448
        %458 = vmatpush.bf16.msra.mxu0 %v447
        %459 = vmatpush.bf16.msra.mxu0 %v446
        %460 = vmatpush.bf16.msra.mxu0 %v445
        %461 = vmatpush.bf16.msra.mxu0 %v444
        %462 = vmatpush.bf16.msra.mxu0 %v443
        %463 = vmatpush.bf16.msra.mxu0 %v442
        %464 = vmatpush.bf16.msra.mxu0 %v441
        %465 = vmatmul.bf16.gmra.mxu0 %v390
        %v466 = vpop.f32.mrf.mxu0
        %v467 = vadd.f32 %v408, %v466
        %v468 = vpop.f32.mrf.mxu0
        %469 = vdwg.mxu0
        %v470 = vmax.f32 %v467, 0.0
        %v471 = vadd.f32 %v470, %v308
        %v472 = vpack.c.bf16 %v471, %v471
        %s473 = scalar_lea.vmem [#allocation5], 64
        %v474 = vld [vmem:[%s473] sm:$0xf]
        %v475 = vld [vmem:[%s473 + $0x4] sm:$0xf]
        %v476 = vld [vmem:[%s473 + $0x8] sm:$0xf]
        %v477 = vld [vmem:[%s473 + $0xc] sm:$0xf]
        %v478 = vld [vmem:[%s473 + $0x10] sm:$0xf]
        %v479 = vld [vmem:[%s473 + $0x14] sm:$0xf]
        %v480 = vld [vmem:[%s473 + $0x18] sm:$0xf]
        %v481 = vld [vmem:[%s473 + $0x1c] sm:$0xf]
        %v482 = vld [vmem:[%s473 + $0x20] sm:$0xf]
        %v483 = vld [vmem:[%s473 + $0x24] sm:$0xf]
        %v484 = vld [vmem:[%s473 + $0x28] sm:$0xf]
        %v485 = vld [vmem:[%s473 + $0x2c] sm:$0xf]
        %v486 = vld [vmem:[%s473 + $0x30] sm:$0xf]
        %v487 = vld [vmem:[%s473 + $0x34] sm:$0xf]
        %v488 = vld [vmem:[%s473 + $0x38] sm:$0xf]
        %v489 = vld [vmem:[%s473 + $0x3c] sm:$0xf]
        %v490 = vld [vmem:[#allocation7 + $0x1] sm:$0x1]
        %v491 = vperm.slane %v490, 0
        %v508 = vunpack.c.l.b16 %v474
        %v509 = vunpack.c.l.b16 %v475
        %v510 = vunpack.c.l.b16 %v476
        %v511 = vunpack.c.l.b16 %v477
        %v512 = vunpack.c.l.b16 %v478
        %v513 = vunpack.c.l.b16 %v479
        %v514 = vunpack.c.l.b16 %v480
        %v515 = vunpack.c.l.b16 %v481
        %v516 = vunpack.c.l.b16 %v482
        %v517 = vunpack.c.l.b16 %v483
        %v518 = vunpack.c.l.b16 %v484
        %v519 = vunpack.c.l.b16 %v485
        %v520 = vunpack.c.l.b16 %v486
        %v521 = vunpack.c.l.b16 %v487
        %v522 = vunpack.c.l.b16 %v488
        %v523 = vunpack.c.l.b16 %v489
        %v524 = vpack.c.b16 %v509, %v508
        %v525 = vpack.c.b16 %v511, %v510
        %v526 = vpack.c.b16 %v513, %v512
        %v527 = vpack.c.b16 %v515, %v514
        %v528 = vpack.c.b16 %v517, %v516
        %v529 = vpack.c.b16 %v519, %v518
        %v530 = vpack.c.b16 %v521, %v520
        %v531 = vpack.c.b16 %v523, %v522
        %540 = vmatpush.bf16.msra.mxu0 %v531
        %541 = vmatpush.bf16.msra.mxu0 %v530
        %542 = vmatpush.bf16.msra.mxu0 %v529
        %543 = vmatpush.bf16.msra.mxu0 %v528
        %544 = vmatpush.bf16.msra.mxu0 %v527
        %545 = vmatpush.bf16.msra.mxu0 %v526
        %546 = vmatpush.bf16.msra.mxu0 %v525
        %547 = vmatpush.bf16.msra.mxu0 %v524
        %548 = vmatmul.bf16.gmra.mxu0 %v472
        %v549 = vpop.f32.mrf.mxu0
        %v550 = vadd.f32 %v491, %v549
        %v551 = vpop.f32.mrf.mxu0
        %552 = vdwg.mxu0
        %v553 = vmax.f32 %v550, 0.0
        %v554 = vpack.c.bf16 %v553, %v553
        %s555 = scalar_lea.vmem [#allocation8], 64
        %v556 = vld [vmem:[%s555] sm:$0xf]
        %v557 = vld [vmem:[%s555 + $0x4] sm:$0xf]
        %v558 = vld [vmem:[%s555 + $0x8] sm:$0xf]
        %v559 = vld [vmem:[%s555 + $0xc] sm:$0xf]
        %v560 = vld [vmem:[%s555 + $0x10] sm:$0xf]
        %v561 = vld [vmem:[%s555 + $0x14] sm:$0xf]
        %v562 = vld [vmem:[%s555 + $0x18] sm:$0xf]
        %v563 = vld [vmem:[%s555 + $0x1c] sm:$0xf]
        %v564 = vld [vmem:[%s555 + $0x20] sm:$0xf]
        %v565 = vld [vmem:[%s555 + $0x24] sm:$0xf]
        %v566 = vld [vmem:[%s555 + $0x28] sm:$0xf]
        %v567 = vld [vmem:[%s555 + $0x2c] sm:$0xf]
        %v568 = vld [vmem:[%s555 + $0x30] sm:$0xf]
        %v569 = vld [vmem:[%s555 + $0x34] sm:$0xf]
        %v570 = vld [vmem:[%s555 + $0x38] sm:$0xf]
        %v571 = vld [vmem:[%s555 + $0x3c] sm:$0xf]
        %v572 = vld [vmem:[#allocation10 + $0x1] sm:$0x1]
        %v573 = vperm.slane %v572, 0
        %v590 = vunpack.c.l.b16 %v556
        %v591 = vunpack.c.l.b16 %v557
        %v592 = vunpack.c.l.b16 %v558
        %v593 = vunpack.c.l.b16 %v559
        %v594 = vunpack.c.l.b16 %v560
        %v595 = vunpack.c.l.b16 %v561
        %v596 = vunpack.c.l.b16 %v562
        %v597 = vunpack.c.l.b16 %v563
        %v598 = vunpack.c.l.b16 %v564
        %v599 = vunpack.c.l.b16 %v565
        %v600 = vunpack.c.l.b16 %v566
        %v601 = vunpack.c.l.b16 %v567
        %v602 = vunpack.c.l.b16 %v568
        %v603 = vunpack.c.l.b16 %v569
        %v604 = vunpack.c.l.b16 %v570
        %v605 = vunpack.c.l.b16 %v571
        %v606 = vpack.c.b16 %v591, %v590
        %v607 = vpack.c.b16 %v593, %v592
        %v608 = vpack.c.b16 %v595, %v594
        %v609 = vpack.c.b16 %v597, %v596
        %v610 = vpack.c.b16 %v599, %v598
        %v611 = vpack.c.b16 %v601, %v600
        %v612 = vpack.c.b16 %v603, %v602
        %v613 = vpack.c.b16 %v605, %v604
        %622 = vmatpush.bf16.msra.mxu0 %v613
        %623 = vmatpush.bf16.msra.mxu0 %v612
        %624 = vmatpush.bf16.msra.mxu0 %v611
        %625 = vmatpush.bf16.msra.mxu0 %v610
        %626 = vmatpush.bf16.msra.mxu0 %v609
        %627 = vmatpush.bf16.msra.mxu0 %v608
        %628 = vmatpush.bf16.msra.mxu0 %v607
        %629 = vmatpush.bf16.msra.mxu0 %v606
        %630 = vmatmul.bf16.gmra.mxu0 %v554
        %v631 = vpop.f32.mrf.mxu0
        %v632 = vadd.f32 %v573, %v631
        %v633 = vpop.f32.mrf.mxu0
        %634 = vdwg.mxu0
        %v635 = vmax.f32 %v632, 0.0
        %v636 = vadd.f32 %v635, %v471
        %v637 = vpack.c.bf16 %v636, %v636
        %s638 = scalar_lea.vmem [#allocation5], 128
        %v639 = vld [vmem:[%s638] sm:$0xf]
        %v640 = vld [vmem:[%s638 + $0x4] sm:$0xf]
        %v641 = vld [vmem:[%s638 + $0x8] sm:$0xf]
        %v642 = vld [vmem:[%s638 + $0xc] sm:$0xf]
        %v643 = vld [vmem:[%s638 + $0x10] sm:$0xf]
        %v644 = vld [vmem:[%s638 + $0x14] sm:$0xf]
        %v645 = vld [vmem:[%s638 + $0x18] sm:$0xf]
        %v646 = vld [vmem:[%s638 + $0x1c] sm:$0xf]
        %v647 = vld [vmem:[%s638 + $0x20] sm:$0xf]
        %v648 = vld [vmem:[%s638 + $0x24] sm:$0xf]
        %v649 = vld [vmem:[%s638 + $0x28] sm:$0xf]
        %v650 = vld [vmem:[%s638 + $0x2c] sm:$0xf]
        %v651 = vld [vmem:[%s638 + $0x30] sm:$0xf]
        %v652 = vld [vmem:[%s638 + $0x34] sm:$0xf]
        %v653 = vld [vmem:[%s638 + $0x38] sm:$0xf]
        %v654 = vld [vmem:[%s638 + $0x3c] sm:$0xf]
        %v655 = vld [vmem:[#allocation7 + $0x2] sm:$0x1]
        %v656 = vperm.slane %v655, 0
        %v673 = vunpack.c.l.b16 %v639
        %v674 = vunpack.c.l.b16 %v640
        %v675 = vunpack.c.l.b16 %v641
        %v676 = vunpack.c.l.b16 %v642
        %v677 = vunpack.c.l.b16 %v643
        %v678 = vunpack.c.l.b16 %v644
        %v679 = vunpack.c.l.b16 %v645
        %v680 = vunpack.c.l.b16 %v646
        %v681 = vunpack.c.l.b16 %v647
        %v682 = vunpack.c.l.b16 %v648
        %v683 = vunpack.c.l.b16 %v649
        %v684 = vunpack.c.l.b16 %v650
        %v685 = vunpack.c.l.b16 %v651
        %v686 = vunpack.c.l.b16 %v652
        %v687 = vunpack.c.l.b16 %v653
        %v688 = vunpack.c.l.b16 %v654
        %v689 = vpack.c.b16 %v674, %v673
        %v690 = vpack.c.b16 %v676, %v675
        %v691 = vpack.c.b16 %v678, %v677
        %v692 = vpack.c.b16 %v680, %v679
        %v693 = vpack.c.b16 %v682, %v681
        %v694 = vpack.c.b16 %v684, %v683
        %v695 = vpack.c.b16 %v686, %v685
        %v696 = vpack.c.b16 %v688, %v687
        %705 = vmatpush.bf16.msra.mxu0 %v696
        %706 = vmatpush.bf16.msra.mxu0 %v695
        %707 = vmatpush.bf16.msra.mxu0 %v694
        %708 = vmatpush.bf16.msra.mxu0 %v693
        %709 = vmatpush.bf16.msra.mxu0 %v692
        %710 = vmatpush.bf16.msra.mxu0 %v691
        %711 = vmatpush.bf16.msra.mxu0 %v690
        %712 = vmatpush.bf16.msra.mxu0 %v689
        %713 = vmatmul.bf16.gmra.mxu0 %v637
        %v714 = vpop.f32.mrf.mxu0
        %v715 = vadd.f32 %v656, %v714
        %v716 = vpop.f32.mrf.mxu0
        %717 = vdwg.mxu0
        %v718 = vmax.f32 %v715, 0.0
        %v719 = vpack.c.bf16 %v718, %v718
        %s720 = scalar_lea.vmem [#allocation8], 128
        %v721 = vld [vmem:[%s720] sm:$0xf]
        %v722 = vld [vmem:[%s720 + $0x4] sm:$0xf]
        %v723 = vld [vmem:[%s720 + $0x8] sm:$0xf]
        %v724 = vld [vmem:[%s720 + $0xc] sm:$0xf]
        %v725 = vld [vmem:[%s720 + $0x10] sm:$0xf]
        %v726 = vld [vmem:[%s720 + $0x14] sm:$0xf]
        %v727 = vld [vmem:[%s720 + $0x18] sm:$0xf]
        %v728 = vld [vmem:[%s720 + $0x1c] sm:$0xf]
        %v729 = vld [vmem:[%s720 + $0x20] sm:$0xf]
        %v730 = vld [vmem:[%s720 + $0x24] sm:$0xf]
        %v731 = vld [vmem:[%s720 + $0x28] sm:$0xf]
        %v732 = vld [vmem:[%s720 + $0x2c] sm:$0xf]
        %v733 = vld [vmem:[%s720 + $0x30] sm:$0xf]
        %v734 = vld [vmem:[%s720 + $0x34] sm:$0xf]
        %v735 = vld [vmem:[%s720 + $0x38] sm:$0xf]
        %v736 = vld [vmem:[%s720 + $0x3c] sm:$0xf]
        %v737 = vld [vmem:[#allocation10 + $0x2] sm:$0x1]
        %v738 = vperm.slane %v737, 0
        %v755 = vunpack.c.l.b16 %v721
        %v756 = vunpack.c.l.b16 %v722
        %v757 = vunpack.c.l.b16 %v723
        %v758 = vunpack.c.l.b16 %v724
        %v759 = vunpack.c.l.b16 %v725
        %v760 = vunpack.c.l.b16 %v726
        %v761 = vunpack.c.l.b16 %v727
        %v762 = vunpack.c.l.b16 %v728
        %v763 = vunpack.c.l.b16 %v729
        %v764 = vunpack.c.l.b16 %v730
        %v765 = vunpack.c.l.b16 %v731
        %v766 = vunpack.c.l.b16 %v732
        %v767 = vunpack.c.l.b16 %v733
        %v768 = vunpack.c.l.b16 %v734
        %v769 = vunpack.c.l.b16 %v735
        %v770 = vunpack.c.l.b16 %v736
        %v771 = vpack.c.b16 %v756, %v755
        %v772 = vpack.c.b16 %v758, %v757
        %v773 = vpack.c.b16 %v760, %v759
        %v774 = vpack.c.b16 %v762, %v761
        %v775 = vpack.c.b16 %v764, %v763
        %v776 = vpack.c.b16 %v766, %v765
        %v777 = vpack.c.b16 %v768, %v767
        %v778 = vpack.c.b16 %v770, %v769
        %787 = vmatpush.bf16.msra.mxu0 %v778
        %788 = vmatpush.bf16.msra.mxu0 %v777
        %789 = vmatpush.bf16.msra.mxu0 %v776
        %790 = vmatpush.bf16.msra.mxu0 %v775
        %791 = vmatpush.bf16.msra.mxu0 %v774
        %792 = vmatpush.bf16.msra.mxu0 %v773
        %793 = vmatpush.bf16.msra.mxu0 %v772
        %794 = vmatpush.bf16.msra.mxu0 %v771
        %795 = vmatmul.bf16.gmra.mxu0 %v719
        %v796 = vpop.f32.mrf.mxu0
        %v797 = vadd.f32 %v738, %v796
        %v798 = vpop.f32.mrf.mxu0
        %799 = vdwg.mxu0
        %v800 = vmax.f32 %v797, 0.0
        %v801 = vadd.f32 %v800, %v636
        %v802 = vpack.c.bf16 %v801, %v801
        %s803 = scalar_lea.vmem [#allocation5], 192
        %v804 = vld [vmem:[%s803] sm:$0xf]
        %v805 = vld [vmem:[%s803 + $0x4] sm:$0xf]
        %v806 = vld [vmem:[%s803 + $0x8] sm:$0xf]
        %v807 = vld [vmem:[%s803 + $0xc] sm:$0xf]
        %v808 = vld [vmem:[%s803 + $0x10] sm:$0xf]
        %v809 = vld [vmem:[%s803 + $0x14] sm:$0xf]
        %v810 = vld [vmem:[%s803 + $0x18] sm:$0xf]
        %v811 = vld [vmem:[%s803 + $0x1c] sm:$0xf]
        %v812 = vld [vmem:[%s803 + $0x20] sm:$0xf]
        %v813 = vld [vmem:[%s803 + $0x24] sm:$0xf]
        %v814 = vld [vmem:[%s803 + $0x28] sm:$0xf]
        %v815 = vld [vmem:[%s803 + $0x2c] sm:$0xf]
        %v816 = vld [vmem:[%s803 + $0x30] sm:$0xf]
        %v817 = vld [vmem:[%s803 + $0x34] sm:$0xf]
        %v818 = vld [vmem:[%s803 + $0x38] sm:$0xf]
        %v819 = vld [vmem:[%s803 + $0x3c] sm:$0xf]
        %v820 = vld [vmem:[#allocation7 + $0x3] sm:$0x1]
        %v821 = vperm.slane %v820, 0
        %v838 = vunpack.c.l.b16 %v804
        %v839 = vunpack.c.l.b16 %v805
        %v840 = vunpack.c.l.b16 %v806
        %v841 = vunpack.c.l.b16 %v807
        %v842 = vunpack.c.l.b16 %v808
        %v843 = vunpack.c.l.b16 %v809
        %v844 = vunpack.c.l.b16 %v810
        %v845 = vunpack.c.l.b16 %v811
        %v846 = vunpack.c.l.b16 %v812
        %v847 = vunpack.c.l.b16 %v813
        %v848 = vunpack.c.l.b16 %v814
        %v849 = vunpack.c.l.b16 %v815
        %v850 = vunpack.c.l.b16 %v816
        %v851 = vunpack.c.l.b16 %v817
        %v852 = vunpack.c.l.b16 %v818
        %v853 = vunpack.c.l.b16 %v819
        %v854 = vpack.c.b16 %v839, %v838
        %v855 = vpack.c.b16 %v841, %v840
        %v856 = vpack.c.b16 %v843, %v842
        %v857 = vpack.c.b16 %v845, %v844
        %v858 = vpack.c.b16 %v847, %v846
        %v859 = vpack.c.b16 %v849, %v848
        %v860 = vpack.c.b16 %v851, %v850
        %v861 = vpack.c.b16 %v853, %v852
        %870 = vmatpush.bf16.msra.mxu0 %v861
        %871 = vmatpush.bf16.msra.mxu0 %v860
        %872 = vmatpush.bf16.msra.mxu0 %v859
        %873 = vmatpush.bf16.msra.mxu0 %v858
        %874 = vmatpush.bf16.msra.mxu0 %v857
        %875 = vmatpush.bf16.msra.mxu0 %v856
        %876 = vmatpush.bf16.msra.mxu0 %v855
        %877 = vmatpush.bf16.msra.mxu0 %v854
        %878 = vmatmul.bf16.gmra.mxu0 %v802
        %v879 = vpop.f32.mrf.mxu0
        %v880 = vadd.f32 %v821, %v879
        %v881 = vpop.f32.mrf.mxu0
        %882 = vdwg.mxu0
        %v883 = vmax.f32 %v880, 0.0
        %v884 = vpack.c.bf16 %v883, %v883
        %s885 = scalar_lea.vmem [#allocation8], 192
        %v886 = vld [vmem:[%s885] sm:$0xf]
        %v887 = vld [vmem:[%s885 + $0x4] sm:$0xf]
        %v888 = vld [vmem:[%s885 + $0x8] sm:$0xf]
        %v889 = vld [vmem:[%s885 + $0xc] sm:$0xf]
        %v890 = vld [vmem:[%s885 + $0x10] sm:$0xf]
        %v891 = vld [vmem:[%s885 + $0x14] sm:$0xf]
        %v892 = vld [vmem:[%s885 + $0x18] sm:$0xf]
        %v893 = vld [vmem:[%s885 + $0x1c] sm:$0xf]
        %v894 = vld [vmem:[%s885 + $0x20] sm:$0xf]
        %v895 = vld [vmem:[%s885 + $0x24] sm:$0xf]
        %v896 = vld [vmem:[%s885 + $0x28] sm:$0xf]
        %v897 = vld [vmem:[%s885 + $0x2c] sm:$0xf]
        %v898 = vld [vmem:[%s885 + $0x30] sm:$0xf]
        %v899 = vld [vmem:[%s885 + $0x34] sm:$0xf]
        %v900 = vld [vmem:[%s885 + $0x38] sm:$0xf]
        %v901 = vld [vmem:[%s885 + $0x3c] sm:$0xf]
        %v902 = vld [vmem:[#allocation10 + $0x3] sm:$0x1]
        %v903 = vperm.slane %v902, 0
        %v920 = vunpack.c.l.b16 %v886
        %v921 = vunpack.c.l.b16 %v887
        %v922 = vunpack.c.l.b16 %v888
        %v923 = vunpack.c.l.b16 %v889
        %v924 = vunpack.c.l.b16 %v890
        %v925 = vunpack.c.l.b16 %v891
        %v926 = vunpack.c.l.b16 %v892
        %v927 = vunpack.c.l.b16 %v893
        %v928 = vunpack.c.l.b16 %v894
        %v929 = vunpack.c.l.b16 %v895
        %v930 = vunpack.c.l.b16 %v896
        %v931 = vunpack.c.l.b16 %v897
        %v932 = vunpack.c.l.b16 %v898
        %v933 = vunpack.c.l.b16 %v899
        %v934 = vunpack.c.l.b16 %v900
        %v935 = vunpack.c.l.b16 %v901
        %v936 = vpack.c.b16 %v921, %v920
        %v937 = vpack.c.b16 %v923, %v922
        %v938 = vpack.c.b16 %v925, %v924
        %v939 = vpack.c.b16 %v927, %v926
        %v940 = vpack.c.b16 %v929, %v928
        %v941 = vpack.c.b16 %v931, %v930
        %v942 = vpack.c.b16 %v933, %v932
        %v943 = vpack.c.b16 %v935, %v934
        %952 = vmatpush.bf16.msra.mxu0 %v943
        %953 = vmatpush.bf16.msra.mxu0 %v942
        %954 = vmatpush.bf16.msra.mxu0 %v941
        %955 = vmatpush.bf16.msra.mxu0 %v940
        %956 = vmatpush.bf16.msra.mxu0 %v939
        %957 = vmatpush.bf16.msra.mxu0 %v938
        %958 = vmatpush.bf16.msra.mxu0 %v937
        %959 = vmatpush.bf16.msra.mxu0 %v936
        %960 = vmatmul.bf16.gmra.mxu0 %v884
        %v961 = vpop.f32.mrf.mxu0
        %v962 = vadd.f32 %v903, %v961
        %v963 = vpop.f32.mrf.mxu0
        %964 = vdwg.mxu0
        %v965 = vmax.f32 %v962, 0.0
        %v966 = vadd.f32 %v965, %v801
        %v967 = vpack.c.bf16 %v966, %v966
        %s968 = scalar_lea.vmem [#allocation5], 256
        %v969 = vld [vmem:[%s968] sm:$0xf]
        %v970 = vld [vmem:[%s968 + $0x4] sm:$0xf]
        %v971 = vld [vmem:[%s968 + $0x8] sm:$0xf]
        %v972 = vld [vmem:[%s968 + $0xc] sm:$0xf]
        %v973 = vld [vmem:[%s968 + $0x10] sm:$0xf]
        %v974 = vld [vmem:[%s968 + $0x14] sm:$0xf]
        %v975 = vld [vmem:[%s968 + $0x18] sm:$0xf]
        %v976 = vld [vmem:[%s968 + $0x1c] sm:$0xf]
        %v977 = vld [vmem:[%s968 + $0x20] sm:$0xf]
        %v978 = vld [vmem:[%s968 + $0x24] sm:$0xf]
        %v979 = vld [vmem:[%s968 + $0x28] sm:$0xf]
        %v980 = vld [vmem:[%s968 + $0x2c] sm:$0xf]
        %v981 = vld [vmem:[%s968 + $0x30] sm:$0xf]
        %v982 = vld [vmem:[%s968 + $0x34] sm:$0xf]
        %v983 = vld [vmem:[%s968 + $0x38] sm:$0xf]
        %v984 = vld [vmem:[%s968 + $0x3c] sm:$0xf]
        %v985 = vld [vmem:[#allocation7 + $0x4] sm:$0x1]
        %v986 = vperm.slane %v985, 0
        %v1003 = vunpack.c.l.b16 %v969
        %v1004 = vunpack.c.l.b16 %v970
        %v1005 = vunpack.c.l.b16 %v971
        %v1006 = vunpack.c.l.b16 %v972
        %v1007 = vunpack.c.l.b16 %v973
        %v1008 = vunpack.c.l.b16 %v974
        %v1009 = vunpack.c.l.b16 %v975
        %v1010 = vunpack.c.l.b16 %v976
        %v1011 = vunpack.c.l.b16 %v977
        %v1012 = vunpack.c.l.b16 %v978
        %v1013 = vunpack.c.l.b16 %v979
        %v1014 = vunpack.c.l.b16 %v980
        %v1015 = vunpack.c.l.b16 %v981
        %v1016 = vunpack.c.l.b16 %v982
        %v1017 = vunpack.c.l.b16 %v983
        %v1018 = vunpack.c.l.b16 %v984
        %v1019 = vpack.c.b16 %v1004, %v1003
        %v1020 = vpack.c.b16 %v1006, %v1005
        %v1021 = vpack.c.b16 %v1008, %v1007
        %v1022 = vpack.c.b16 %v1010, %v1009
        %v1023 = vpack.c.b16 %v1012, %v1011
        %v1024 = vpack.c.b16 %v1014, %v1013
        %v1025 = vpack.c.b16 %v1016, %v1015
        %v1026 = vpack.c.b16 %v1018, %v1017
        %1035 = vmatpush.bf16.msra.mxu0 %v1026
        %1036 = vmatpush.bf16.msra.mxu0 %v1025
        %1037 = vmatpush.bf16.msra.mxu0 %v1024
        %1038 = vmatpush.bf16.msra.mxu0 %v1023
        %1039 = vmatpush.bf16.msra.mxu0 %v1022
        %1040 = vmatpush.bf16.msra.mxu0 %v1021
        %1041 = vmatpush.bf16.msra.mxu0 %v1020
        %1042 = vmatpush.bf16.msra.mxu0 %v1019
        %1043 = vmatmul.bf16.gmra.mxu0 %v967
        %v1044 = vpop.f32.mrf.mxu0
        %v1045 = vadd.f32 %v986, %v1044
        %v1046 = vpop.f32.mrf.mxu0
        %1047 = vdwg.mxu0
        %v1048 = vmax.f32 %v1045, 0.0
        %v1049 = vpack.c.bf16 %v1048, %v1048
        %s1050 = scalar_lea.vmem [#allocation8], 256
        %v1051 = vld [vmem:[%s1050] sm:$0xf]
        %v1052 = vld [vmem:[%s1050 + $0x4] sm:$0xf]
        %v1053 = vld [vmem:[%s1050 + $0x8] sm:$0xf]
        %v1054 = vld [vmem:[%s1050 + $0xc] sm:$0xf]
        %v1055 = vld [vmem:[%s1050 + $0x10] sm:$0xf]
        %v1056 = vld [vmem:[%s1050 + $0x14] sm:$0xf]
        %v1057 = vld [vmem:[%s1050 + $0x18] sm:$0xf]
        %v1058 = vld [vmem:[%s1050 + $0x1c] sm:$0xf]
        %v1059 = vld [vmem:[%s1050 + $0x20] sm:$0xf]
        %v1060 = vld [vmem:[%s1050 + $0x24] sm:$0xf]
        %v1061 = vld [vmem:[%s1050 + $0x28] sm:$0xf]
        %v1062 = vld [vmem:[%s1050 + $0x2c] sm:$0xf]
        %v1063 = vld [vmem:[%s1050 + $0x30] sm:$0xf]
        %v1064 = vld [vmem:[%s1050 + $0x34] sm:$0xf]
        %v1065 = vld [vmem:[%s1050 + $0x38] sm:$0xf]
        %v1066 = vld [vmem:[%s1050 + $0x3c] sm:$0xf]
        %v1067 = vld [vmem:[#allocation10 + $0x4] sm:$0x1]
        %v1068 = vperm.slane %v1067, 0
        %v1085 = vunpack.c.l.b16 %v1051
        %v1086 = vunpack.c.l.b16 %v1052
        %v1087 = vunpack.c.l.b16 %v1053
        %v1088 = vunpack.c.l.b16 %v1054
        %v1089 = vunpack.c.l.b16 %v1055
        %v1090 = vunpack.c.l.b16 %v1056
        %v1091 = vunpack.c.l.b16 %v1057
        %v1092 = vunpack.c.l.b16 %v1058
        %v1093 = vunpack.c.l.b16 %v1059
        %v1094 = vunpack.c.l.b16 %v1060
        %v1095 = vunpack.c.l.b16 %v1061
        %v1096 = vunpack.c.l.b16 %v1062
        %v1097 = vunpack.c.l.b16 %v1063
        %v1098 = vunpack.c.l.b16 %v1064
        %v1099 = vunpack.c.l.b16 %v1065
        %v1100 = vunpack.c.l.b16 %v1066
        %v1101 = vpack.c.b16 %v1086, %v1085
        %v1102 = vpack.c.b16 %v1088, %v1087
        %v1103 = vpack.c.b16 %v1090, %v1089
        %v1104 = vpack.c.b16 %v1092, %v1091
        %v1105 = vpack.c.b16 %v1094, %v1093
        %v1106 = vpack.c.b16 %v1096, %v1095
        %v1107 = vpack.c.b16 %v1098, %v1097
        %v1108 = vpack.c.b16 %v1100, %v1099
        %1117 = vmatpush.bf16.msra.mxu0 %v1108
        %1118 = vmatpush.bf16.msra.mxu0 %v1107
        %1119 = vmatpush.bf16.msra.mxu0 %v1106
        %1120 = vmatpush.bf16.msra.mxu0 %v1105
        %1121 = vmatpush.bf16.msra.mxu0 %v1104
        %1122 = vmatpush.bf16.msra.mxu0 %v1103
        %1123 = vmatpush.bf16.msra.mxu0 %v1102
        %1124 = vmatpush.bf16.msra.mxu0 %v1101
        %1125 = vmatmul.bf16.gmra.mxu0 %v1049
        %v1126 = vpop.f32.mrf.mxu0
        %v1127 = vadd.f32 %v1068, %v1126
        %v1128 = vpop.f32.mrf.mxu0
        %1129 = vdwg.mxu0
        %v1130 = vmax.f32 %v1127, 0.0
        %v1131 = vadd.f32 %v1130, %v966
        %v1132 = vpack.c.bf16 %v1131, %v1131
        %s1133 = scalar_lea.vmem [#allocation5], 320
        %v1134 = vld [vmem:[%s1133] sm:$0xf]
        %v1135 = vld [vmem:[%s1133 + $0x4] sm:$0xf]
        %v1136 = vld [vmem:[%s1133 + $0x8] sm:$0xf]
        %v1137 = vld [vmem:[%s1133 + $0xc] sm:$0xf]
        %v1138 = vld [vmem:[%s1133 + $0x10] sm:$0xf]
        %v1139 = vld [vmem:[%s1133 + $0x14] sm:$0xf]
        %v1140 = vld [vmem:[%s1133 + $0x18] sm:$0xf]
        %v1141 = vld [vmem:[%s1133 + $0x1c] sm:$0xf]
        %v1142 = vld [vmem:[%s1133 + $0x20] sm:$0xf]
        %v1143 = vld [vmem:[%s1133 + $0x24] sm:$0xf]
        %v1144 = vld [vmem:[%s1133 + $0x28] sm:$0xf]
        %v1145 = vld [vmem:[%s1133 + $0x2c] sm:$0xf]
        %v1146 = vld [vmem:[%s1133 + $0x30] sm:$0xf]
        %v1147 = vld [vmem:[%s1133 + $0x34] sm:$0xf]
        %v1148 = vld [vmem:[%s1133 + $0x38] sm:$0xf]
        %v1149 = vld [vmem:[%s1133 + $0x3c] sm:$0xf]
        %v1150 = vld [vmem:[#allocation7 + $0x5] sm:$0x1]
        %v1151 = vperm.slane %v1150, 0
        %v1168 = vunpack.c.l.b16 %v1134
        %v1169 = vunpack.c.l.b16 %v1135
        %v1170 = vunpack.c.l.b16 %v1136
        %v1171 = vunpack.c.l.b16 %v1137
        %v1172 = vunpack.c.l.b16 %v1138
        %v1173 = vunpack.c.l.b16 %v1139
        %v1174 = vunpack.c.l.b16 %v1140
        %v1175 = vunpack.c.l.b16 %v1141
        %v1176 = vunpack.c.l.b16 %v1142
        %v1177 = vunpack.c.l.b16 %v1143
        %v1178 = vunpack.c.l.b16 %v1144
        %v1179 = vunpack.c.l.b16 %v1145
        %v1180 = vunpack.c.l.b16 %v1146
        %v1181 = vunpack.c.l.b16 %v1147
        %v1182 = vunpack.c.l.b16 %v1148
        %v1183 = vunpack.c.l.b16 %v1149
        %v1184 = vpack.c.b16 %v1169, %v1168
        %v1185 = vpack.c.b16 %v1171, %v1170
        %v1186 = vpack.c.b16 %v1173, %v1172
        %v1187 = vpack.c.b16 %v1175, %v1174
        %v1188 = vpack.c.b16 %v1177, %v1176
        %v1189 = vpack.c.b16 %v1179, %v1178
        %v1190 = vpack.c.b16 %v1181, %v1180
        %v1191 = vpack.c.b16 %v1183, %v1182
        %1200 = vmatpush.bf16.msra.mxu0 %v1191
        %1201 = vmatpush.bf16.msra.mxu0 %v1190
        %1202 = vmatpush.bf16.msra.mxu0 %v1189
        %1203 = vmatpush.bf16.msra.mxu0 %v1188
        %1204 = vmatpush.bf16.msra.mxu0 %v1187
        %1205 = vmatpush.bf16.msra.mxu0 %v1186
        %1206 = vmatpush.bf16.msra.mxu0 %v1185
        %1207 = vmatpush.bf16.msra.mxu0 %v1184
        %1208 = vmatmul.bf16.gmra.mxu0 %v1132
        %v1209 = vpop.f32.mrf.mxu0
        %v1210 = vadd.f32 %v1151, %v1209
        %v1211 = vpop.f32.mrf.mxu0
        %1212 = vdwg.mxu0
        %v1213 = vmax.f32 %v1210, 0.0
        %v1214 = vpack.c.bf16 %v1213, %v1213
        %s1215 = scalar_lea.vmem [#allocation8], 320
        %v1216 = vld [vmem:[%s1215] sm:$0xf]
        %v1217 = vld [vmem:[%s1215 + $0x4] sm:$0xf]
        %v1218 = vld [vmem:[%s1215 + $0x8] sm:$0xf]
        %v1219 = vld [vmem:[%s1215 + $0xc] sm:$0xf]
        %v1220 = vld [vmem:[%s1215 + $0x10] sm:$0xf]
        %v1221 = vld [vmem:[%s1215 + $0x14] sm:$0xf]
        %v1222 = vld [vmem:[%s1215 + $0x18] sm:$0xf]
        %v1223 = vld [vmem:[%s1215 + $0x1c] sm:$0xf]
        %v1224 = vld [vmem:[%s1215 + $0x20] sm:$0xf]
        %v1225 = vld [vmem:[%s1215 + $0x24] sm:$0xf]
        %v1226 = vld [vmem:[%s1215 + $0x28] sm:$0xf]
        %v1227 = vld [vmem:[%s1215 + $0x2c] sm:$0xf]
        %v1228 = vld [vmem:[%s1215 + $0x30] sm:$0xf]
        %v1229 = vld [vmem:[%s1215 + $0x34] sm:$0xf]
        %v1230 = vld [vmem:[%s1215 + $0x38] sm:$0xf]
        %v1231 = vld [vmem:[%s1215 + $0x3c] sm:$0xf]
        %v1232 = vld [vmem:[#allocation10 + $0x5] sm:$0x1]
        %v1233 = vperm.slane %v1232, 0
        %v1250 = vunpack.c.l.b16 %v1216
        %v1251 = vunpack.c.l.b16 %v1217
        %v1252 = vunpack.c.l.b16 %v1218
        %v1253 = vunpack.c.l.b16 %v1219
        %v1254 = vunpack.c.l.b16 %v1220
        %v1255 = vunpack.c.l.b16 %v1221
        %v1256 = vunpack.c.l.b16 %v1222
        %v1257 = vunpack.c.l.b16 %v1223
        %v1258 = vunpack.c.l.b16 %v1224
        %v1259 = vunpack.c.l.b16 %v1225
        %v1260 = vunpack.c.l.b16 %v1226
        %v1261 = vunpack.c.l.b16 %v1227
        %v1262 = vunpack.c.l.b16 %v1228
        %v1263 = vunpack.c.l.b16 %v1229
        %v1264 = vunpack.c.l.b16 %v1230
        %v1265 = vunpack.c.l.b16 %v1231
        %v1266 = vpack.c.b16 %v1251, %v1250
        %v1267 = vpack.c.b16 %v1253, %v1252
        %v1268 = vpack.c.b16 %v1255, %v1254
        %v1269 = vpack.c.b16 %v1257, %v1256
        %v1270 = vpack.c.b16 %v1259, %v1258
        %v1271 = vpack.c.b16 %v1261, %v1260
        %v1272 = vpack.c.b16 %v1263, %v1262
        %v1273 = vpack.c.b16 %v1265, %v1264
        %1282 = vmatpush.bf16.msra.mxu0 %v1273
        %1283 = vmatpush.bf16.msra.mxu0 %v1272
        %1284 = vmatpush.bf16.msra.mxu0 %v1271
        %1285 = vmatpush.bf16.msra.mxu0 %v1270
        %1286 = vmatpush.bf16.msra.mxu0 %v1269
        %1287 = vmatpush.bf16.msra.mxu0 %v1268
        %1288 = vmatpush.bf16.msra.mxu0 %v1267
        %1289 = vmatpush.bf16.msra.mxu0 %v1266
        %1290 = vmatmul.bf16.gmra.mxu0 %v1214
        %v1291 = vpop.f32.mrf.mxu0
        %v1292 = vadd.f32 %v1233, %v1291
        %v1293 = vpop.f32.mrf.mxu0
        %1294 = vdwg.mxu0
        %v1295 = vmax.f32 %v1292, 0.0
        %v1296 = vadd.f32 %v1295, %v1131
        %v1297 = vpack.c.bf16 %v1296, %v1296
        %s1298 = scalar_lea.vmem [#allocation5], 384
        %v1299 = vld [vmem:[%s1298] sm:$0xf]
        %v1300 = vld [vmem:[%s1298 + $0x4] sm:$0xf]
        %v1301 = vld [vmem:[%s1298 + $0x8] sm:$0xf]
        %v1302 = vld [vmem:[%s1298 + $0xc] sm:$0xf]
        %v1303 = vld [vmem:[%s1298 + $0x10] sm:$0xf]
        %v1304 = vld [vmem:[%s1298 + $0x14] sm:$0xf]
        %v1305 = vld [vmem:[%s1298 + $0x18] sm:$0xf]
        %v1306 = vld [vmem:[%s1298 + $0x1c] sm:$0xf]
        %v1307 = vld [vmem:[%s1298 + $0x20] sm:$0xf]
        %v1308 = vld [vmem:[%s1298 + $0x24] sm:$0xf]
        %v1309 = vld [vmem:[%s1298 + $0x28] sm:$0xf]
        %v1310 = vld [vmem:[%s1298 + $0x2c] sm:$0xf]
        %v1311 = vld [vmem:[%s1298 + $0x30] sm:$0xf]
        %v1312 = vld [vmem:[%s1298 + $0x34] sm:$0xf]
        %v1313 = vld [vmem:[%s1298 + $0x38] sm:$0xf]
        %v1314 = vld [vmem:[%s1298 + $0x3c] sm:$0xf]
        %v1315 = vld [vmem:[#allocation7 + $0x6] sm:$0x1]
        %v1316 = vperm.slane %v1315, 0
        %v1333 = vunpack.c.l.b16 %v1299
        %v1334 = vunpack.c.l.b16 %v1300
        %v1335 = vunpack.c.l.b16 %v1301
        %v1336 = vunpack.c.l.b16 %v1302
        %v1337 = vunpack.c.l.b16 %v1303
        %v1338 = vunpack.c.l.b16 %v1304
        %v1339 = vunpack.c.l.b16 %v1305
        %v1340 = vunpack.c.l.b16 %v1306
        %v1341 = vunpack.c.l.b16 %v1307
        %v1342 = vunpack.c.l.b16 %v1308
        %v1343 = vunpack.c.l.b16 %v1309
        %v1344 = vunpack.c.l.b16 %v1310
        %v1345 = vunpack.c.l.b16 %v1311
        %v1346 = vunpack.c.l.b16 %v1312
        %v1347 = vunpack.c.l.b16 %v1313
        %v1348 = vunpack.c.l.b16 %v1314
        %v1349 = vpack.c.b16 %v1334, %v1333
        %v1350 = vpack.c.b16 %v1336, %v1335
        %v1351 = vpack.c.b16 %v1338, %v1337
        %v1352 = vpack.c.b16 %v1340, %v1339
        %v1353 = vpack.c.b16 %v1342, %v1341
        %v1354 = vpack.c.b16 %v1344, %v1343
        %v1355 = vpack.c.b16 %v1346, %v1345
        %v1356 = vpack.c.b16 %v1348, %v1347
        %1365 = vmatpush.bf16.msra.mxu0 %v1356
        %1366 = vmatpush.bf16.msra.mxu0 %v1355
        %1367 = vmatpush.bf16.msra.mxu0 %v1354
        %1368 = vmatpush.bf16.msra.mxu0 %v1353
        %1369 = vmatpush.bf16.msra.mxu0 %v1352
        %1370 = vmatpush.bf16.msra.mxu0 %v1351
        %1371 = vmatpush.bf16.msra.mxu0 %v1350
        %1372 = vmatpush.bf16.msra.mxu0 %v1349
        %1373 = vmatmul.bf16.gmra.mxu0 %v1297
        %v1374 = vpop.f32.mrf.mxu0
        %v1375 = vadd.f32 %v1316, %v1374
        %v1376 = vpop.f32.mrf.mxu0
        %1377 = vdwg.mxu0
        %v1378 = vmax.f32 %v1375, 0.0
        %v1379 = vpack.c.bf16 %v1378, %v1378
        %s1380 = scalar_lea.vmem [#allocation8], 384
        %v1381 = vld [vmem:[%s1380] sm:$0xf]
        %v1382 = vld [vmem:[%s1380 + $0x4] sm:$0xf]
        %v1383 = vld [vmem:[%s1380 + $0x8] sm:$0xf]
        %v1384 = vld [vmem:[%s1380 + $0xc] sm:$0xf]
        %v1385 = vld [vmem:[%s1380 + $0x10] sm:$0xf]
        %v1386 = vld [vmem:[%s1380 + $0x14] sm:$0xf]
        %v1387 = vld [vmem:[%s1380 + $0x18] sm:$0xf]
        %v1388 = vld [vmem:[%s1380 + $0x1c] sm:$0xf]
        %v1389 = vld [vmem:[%s1380 + $0x20] sm:$0xf]
        %v1390 = vld [vmem:[%s1380 + $0x24] sm:$0xf]
        %v1391 = vld [vmem:[%s1380 + $0x28] sm:$0xf]
        %v1392 = vld [vmem:[%s1380 + $0x2c] sm:$0xf]
        %v1393 = vld [vmem:[%s1380 + $0x30] sm:$0xf]
        %v1394 = vld [vmem:[%s1380 + $0x34] sm:$0xf]
        %v1395 = vld [vmem:[%s1380 + $0x38] sm:$0xf]
        %v1396 = vld [vmem:[%s1380 + $0x3c] sm:$0xf]
        %v1397 = vld [vmem:[#allocation10 + $0x6] sm:$0x1]
        %v1398 = vperm.slane %v1397, 0
        %v1415 = vunpack.c.l.b16 %v1381
        %v1416 = vunpack.c.l.b16 %v1382
        %v1417 = vunpack.c.l.b16 %v1383
        %v1418 = vunpack.c.l.b16 %v1384
        %v1419 = vunpack.c.l.b16 %v1385
        %v1420 = vunpack.c.l.b16 %v1386
        %v1421 = vunpack.c.l.b16 %v1387
        %v1422 = vunpack.c.l.b16 %v1388
        %v1423 = vunpack.c.l.b16 %v1389
        %v1424 = vunpack.c.l.b16 %v1390
        %v1425 = vunpack.c.l.b16 %v1391
        %v1426 = vunpack.c.l.b16 %v1392
        %v1427 = vunpack.c.l.b16 %v1393
        %v1428 = vunpack.c.l.b16 %v1394
        %v1429 = vunpack.c.l.b16 %v1395
        %v1430 = vunpack.c.l.b16 %v1396
        %v1431 = vpack.c.b16 %v1416, %v1415
        %v1432 = vpack.c.b16 %v1418, %v1417
        %v1433 = vpack.c.b16 %v1420, %v1419
        %v1434 = vpack.c.b16 %v1422, %v1421
        %v1435 = vpack.c.b16 %v1424, %v1423
        %v1436 = vpack.c.b16 %v1426, %v1425
        %v1437 = vpack.c.b16 %v1428, %v1427
        %v1438 = vpack.c.b16 %v1430, %v1429
        %1447 = vmatpush.bf16.msra.mxu0 %v1438
        %1448 = vmatpush.bf16.msra.mxu0 %v1437
        %1449 = vmatpush.bf16.msra.mxu0 %v1436
        %1450 = vmatpush.bf16.msra.mxu0 %v1435
        %1451 = vmatpush.bf16.msra.mxu0 %v1434
        %1452 = vmatpush.bf16.msra.mxu0 %v1433
        %1453 = vmatpush.bf16.msra.mxu0 %v1432
        %1454 = vmatpush.bf16.msra.mxu0 %v1431
        %1455 = vmatmul.bf16.gmra.mxu0 %v1379
        %v1456 = vpop.f32.mrf.mxu0
        %v1457 = vadd.f32 %v1398, %v1456
        %v1458 = vpop.f32.mrf.mxu0
        %1459 = vdwg.mxu0
        %v1460 = vmax.f32 %v1457, 0.0
        %v1461 = vadd.f32 %v1460, %v1296
        %v1462 = vpack.c.bf16 %v1461, %v1461
        %s1463 = scalar_lea.vmem [#allocation5], 448
        %v1464 = vld [vmem:[%s1463] sm:$0xf]
        %v1465 = vld [vmem:[%s1463 + $0x4] sm:$0xf]
        %v1466 = vld [vmem:[%s1463 + $0x8] sm:$0xf]
        %v1467 = vld [vmem:[%s1463 + $0xc] sm:$0xf]
        %v1468 = vld [vmem:[%s1463 + $0x10] sm:$0xf]
        %v1469 = vld [vmem:[%s1463 + $0x14] sm:$0xf]
        %v1470 = vld [vmem:[%s1463 + $0x18] sm:$0xf]
        %v1471 = vld [vmem:[%s1463 + $0x1c] sm:$0xf]
        %v1472 = vld [vmem:[%s1463 + $0x20] sm:$0xf]
        %v1473 = vld [vmem:[%s1463 + $0x24] sm:$0xf]
        %v1474 = vld [vmem:[%s1463 + $0x28] sm:$0xf]
        %v1475 = vld [vmem:[%s1463 + $0x2c] sm:$0xf]
        %v1476 = vld [vmem:[%s1463 + $0x30] sm:$0xf]
        %v1477 = vld [vmem:[%s1463 + $0x34] sm:$0xf]
        %v1478 = vld [vmem:[%s1463 + $0x38] sm:$0xf]
        %v1479 = vld [vmem:[%s1463 + $0x3c] sm:$0xf]
        %v1480 = vld [vmem:[#allocation7 + $0x7] sm:$0x1]
        %v1481 = vperm.slane %v1480, 0
        %v1498 = vunpack.c.l.b16 %v1464
        %v1499 = vunpack.c.l.b16 %v1465
        %v1500 = vunpack.c.l.b16 %v1466
        %v1501 = vunpack.c.l.b16 %v1467
        %v1502 = vunpack.c.l.b16 %v1468
        %v1503 = vunpack.c.l.b16 %v1469
        %v1504 = vunpack.c.l.b16 %v1470
        %v1505 = vunpack.c.l.b16 %v1471
        %v1506 = vunpack.c.l.b16 %v1472
        %v1507 = vunpack.c.l.b16 %v1473
        %v1508 = vunpack.c.l.b16 %v1474
        %v1509 = vunpack.c.l.b16 %v1475
        %v1510 = vunpack.c.l.b16 %v1476
        %v1511 = vunpack.c.l.b16 %v1477
        %v1512 = vunpack.c.l.b16 %v1478
        %v1513 = vunpack.c.l.b16 %v1479
        %v1514 = vpack.c.b16 %v1499, %v1498
        %v1515 = vpack.c.b16 %v1501, %v1500
        %v1516 = vpack.c.b16 %v1503, %v1502
        %v1517 = vpack.c.b16 %v1505, %v1504
        %v1518 = vpack.c.b16 %v1507, %v1506
        %v1519 = vpack.c.b16 %v1509, %v1508
        %v1520 = vpack.c.b16 %v1511, %v1510
        %v1521 = vpack.c.b16 %v1513, %v1512
        %1530 = vmatpush.bf16.msra.mxu0 %v1521
        %1531 = vmatpush.bf16.msra.mxu0 %v1520
        %1532 = vmatpush.bf16.msra.mxu0 %v1519
        %1533 = vmatpush.bf16.msra.mxu0 %v1518
        %1534 = vmatpush.bf16.msra.mxu0 %v1517
        %1535 = vmatpush.bf16.msra.mxu0 %v1516
        %1536 = vmatpush.bf16.msra.mxu0 %v1515
        %1537 = vmatpush.bf16.msra.mxu0 %v1514
        %1538 = vmatmul.bf16.gmra.mxu0 %v1462
        %v1539 = vpop.f32.mrf.mxu0
        %v1540 = vadd.f32 %v1481, %v1539
        %v1541 = vpop.f32.mrf.mxu0
        %1542 = vdwg.mxu0
        %v1543 = vmax.f32 %v1540, 0.0
        %v1544 = vpack.c.bf16 %v1543, %v1543
        %s1545 = scalar_lea.vmem [#allocation8], 448
        %v1546 = vld [vmem:[%s1545] sm:$0xf]
        %v1547 = vld [vmem:[%s1545 + $0x4] sm:$0xf]
        %v1548 = vld [vmem:[%s1545 + $0x8] sm:$0xf]
        %v1549 = vld [vmem:[%s1545 + $0xc] sm:$0xf]
        %v1550 = vld [vmem:[%s1545 + $0x10] sm:$0xf]
        %v1551 = vld [vmem:[%s1545 + $0x14] sm:$0xf]
        %v1552 = vld [vmem:[%s1545 + $0x18] sm:$0xf]
        %v1553 = vld [vmem:[%s1545 + $0x1c] sm:$0xf]
        %v1554 = vld [vmem:[%s1545 + $0x20] sm:$0xf]
        %v1555 = vld [vmem:[%s1545 + $0x24] sm:$0xf]
        %v1556 = vld [vmem:[%s1545 + $0x28] sm:$0xf]
        %v1557 = vld [vmem:[%s1545 + $0x2c] sm:$0xf]
        %v1558 = vld [vmem:[%s1545 + $0x30] sm:$0xf]
        %v1559 = vld [vmem:[%s1545 + $0x34] sm:$0xf]
        %v1560 = vld [vmem:[%s1545 + $0x38] sm:$0xf]
        %v1561 = vld [vmem:[%s1545 + $0x3c] sm:$0xf]
        %v1562 = vld [vmem:[#allocation10 + $0x7] sm:$0x1]
        %v1563 = vperm.slane %v1562, 0
        %v1580 = vunpack.c.l.b16 %v1546
        %v1581 = vunpack.c.l.b16 %v1547
        %v1582 = vunpack.c.l.b16 %v1548
        %v1583 = vunpack.c.l.b16 %v1549
        %v1584 = vunpack.c.l.b16 %v1550
        %v1585 = vunpack.c.l.b16 %v1551
        %v1586 = vunpack.c.l.b16 %v1552
        %v1587 = vunpack.c.l.b16 %v1553
        %v1588 = vunpack.c.l.b16 %v1554
        %v1589 = vunpack.c.l.b16 %v1555
        %v1590 = vunpack.c.l.b16 %v1556
        %v1591 = vunpack.c.l.b16 %v1557
        %v1592 = vunpack.c.l.b16 %v1558
        %v1593 = vunpack.c.l.b16 %v1559
        %v1594 = vunpack.c.l.b16 %v1560
        %v1595 = vunpack.c.l.b16 %v1561
        %v1596 = vpack.c.b16 %v1581, %v1580
        %v1597 = vpack.c.b16 %v1583, %v1582
        %v1598 = vpack.c.b16 %v1585, %v1584
        %v1599 = vpack.c.b16 %v1587, %v1586
        %v1600 = vpack.c.b16 %v1589, %v1588
        %v1601 = vpack.c.b16 %v1591, %v1590
        %v1602 = vpack.c.b16 %v1593, %v1592
        %v1603 = vpack.c.b16 %v1595, %v1594
        %1612 = vmatpush.bf16.msra.mxu0 %v1603
        %1613 = vmatpush.bf16.msra.mxu0 %v1602
        %1614 = vmatpush.bf16.msra.mxu0 %v1601
        %1615 = vmatpush.bf16.msra.mxu0 %v1600
        %1616 = vmatpush.bf16.msra.mxu0 %v1599
        %1617 = vmatpush.bf16.msra.mxu0 %v1598
        %1618 = vmatpush.bf16.msra.mxu0 %v1597
        %1619 = vmatpush.bf16.msra.mxu0 %v1596
        %1620 = vmatmul.bf16.gmra.mxu0 %v1544
        %v1621 = vpop.f32.mrf.mxu0
        %v1622 = vadd.f32 %v1563, %v1621
        %v1623 = vpop.f32.mrf.mxu0
        %1624 = vdwg.mxu0
        %v1625 = vmax.f32 %v1622, 0.0
        %v1626 = vadd.f32 %v1625, %v1461
        %v1627 = vpack.c.bf16 %v1626, %v1626
        %s1628 = scalar_lea.vmem [#allocation5], 512
        %v1629 = vld [vmem:[%s1628] sm:$0xf]
        %v1630 = vld [vmem:[%s1628 + $0x4] sm:$0xf]
        %v1631 = vld [vmem:[%s1628 + $0x8] sm:$0xf]
        %v1632 = vld [vmem:[%s1628 + $0xc] sm:$0xf]
        %v1633 = vld [vmem:[%s1628 + $0x10] sm:$0xf]
        %v1634 = vld [vmem:[%s1628 + $0x14] sm:$0xf]
        %v1635 = vld [vmem:[%s1628 + $0x18] sm:$0xf]
        %v1636 = vld [vmem:[%s1628 + $0x1c] sm:$0xf]
        %v1637 = vld [vmem:[%s1628 + $0x20] sm:$0xf]
        %v1638 = vld [vmem:[%s1628 + $0x24] sm:$0xf]
        %v1639 = vld [vmem:[%s1628 + $0x28] sm:$0xf]
        %v1640 = vld [vmem:[%s1628 + $0x2c] sm:$0xf]
        %v1641 = vld [vmem:[%s1628 + $0x30] sm:$0xf]
        %v1642 = vld [vmem:[%s1628 + $0x34] sm:$0xf]
        %v1643 = vld [vmem:[%s1628 + $0x38] sm:$0xf]
        %v1644 = vld [vmem:[%s1628 + $0x3c] sm:$0xf]
        %v1645 = vld [vmem:[#allocation7 + $0x8] sm:$0x1]
        %v1646 = vperm.slane %v1645, 0
        %v1663 = vunpack.c.l.b16 %v1629
        %v1664 = vunpack.c.l.b16 %v1630
        %v1665 = vunpack.c.l.b16 %v1631
        %v1666 = vunpack.c.l.b16 %v1632
        %v1667 = vunpack.c.l.b16 %v1633
        %v1668 = vunpack.c.l.b16 %v1634
        %v1669 = vunpack.c.l.b16 %v1635
        %v1670 = vunpack.c.l.b16 %v1636
        %v1671 = vunpack.c.l.b16 %v1637
        %v1672 = vunpack.c.l.b16 %v1638
        %v1673 = vunpack.c.l.b16 %v1639
        %v1674 = vunpack.c.l.b16 %v1640
        %v1675 = vunpack.c.l.b16 %v1641
        %v1676 = vunpack.c.l.b16 %v1642
        %v1677 = vunpack.c.l.b16 %v1643
        %v1678 = vunpack.c.l.b16 %v1644
        %v1679 = vpack.c.b16 %v1664, %v1663
        %v1680 = vpack.c.b16 %v1666, %v1665
        %v1681 = vpack.c.b16 %v1668, %v1667
        %v1682 = vpack.c.b16 %v1670, %v1669
        %v1683 = vpack.c.b16 %v1672, %v1671
        %v1684 = vpack.c.b16 %v1674, %v1673
        %v1685 = vpack.c.b16 %v1676, %v1675
        %v1686 = vpack.c.b16 %v1678, %v1677
        %1695 = vmatpush.bf16.msra.mxu0 %v1686
        %1696 = vmatpush.bf16.msra.mxu0 %v1685
        %1697 = vmatpush.bf16.msra.mxu0 %v1684
        %1698 = vmatpush.bf16.msra.mxu0 %v1683
        %1699 = vmatpush.bf16.msra.mxu0 %v1682
        %1700 = vmatpush.bf16.msra.mxu0 %v1681
        %1701 = vmatpush.bf16.msra.mxu0 %v1680
        %1702 = vmatpush.bf16.msra.mxu0 %v1679
        %1703 = vmatmul.bf16.gmra.mxu0 %v1627
        %v1704 = vpop.f32.mrf.mxu0
        %v1705 = vadd.f32 %v1646, %v1704
        %v1706 = vpop.f32.mrf.mxu0
        %1707 = vdwg.mxu0
        %v1708 = vmax.f32 %v1705, 0.0
        %v1709 = vpack.c.bf16 %v1708, %v1708
        %s1710 = scalar_lea.vmem [#allocation8], 512
        %v1711 = vld [vmem:[%s1710] sm:$0xf]
        %v1712 = vld [vmem:[%s1710 + $0x4] sm:$0xf]
        %v1713 = vld [vmem:[%s1710 + $0x8] sm:$0xf]
        %v1714 = vld [vmem:[%s1710 + $0xc] sm:$0xf]
        %v1715 = vld [vmem:[%s1710 + $0x10] sm:$0xf]
        %v1716 = vld [vmem:[%s1710 + $0x14] sm:$0xf]
        %v1717 = vld [vmem:[%s1710 + $0x18] sm:$0xf]
        %v1718 = vld [vmem:[%s1710 + $0x1c] sm:$0xf]
        %v1719 = vld [vmem:[%s1710 + $0x20] sm:$0xf]
        %v1720 = vld [vmem:[%s1710 + $0x24] sm:$0xf]
        %v1721 = vld [vmem:[%s1710 + $0x28] sm:$0xf]
        %v1722 = vld [vmem:[%s1710 + $0x2c] sm:$0xf]
        %v1723 = vld [vmem:[%s1710 + $0x30] sm:$0xf]
        %v1724 = vld [vmem:[%s1710 + $0x34] sm:$0xf]
        %v1725 = vld [vmem:[%s1710 + $0x38] sm:$0xf]
        %v1726 = vld [vmem:[%s1710 + $0x3c] sm:$0xf]
        %v1727 = vld [vmem:[#allocation10 + $0x8] sm:$0x1]
        %v1728 = vperm.slane %v1727, 0
        %v1745 = vunpack.c.l.b16 %v1711
        %v1746 = vunpack.c.l.b16 %v1712
        %v1747 = vunpack.c.l.b16 %v1713
        %v1748 = vunpack.c.l.b16 %v1714
        %v1749 = vunpack.c.l.b16 %v1715
        %v1750 = vunpack.c.l.b16 %v1716
        %v1751 = vunpack.c.l.b16 %v1717
        %v1752 = vunpack.c.l.b16 %v1718
        %v1753 = vunpack.c.l.b16 %v1719
        %v1754 = vunpack.c.l.b16 %v1720
        %v1755 = vunpack.c.l.b16 %v1721
        %v1756 = vunpack.c.l.b16 %v1722
        %v1757 = vunpack.c.l.b16 %v1723
        %v1758 = vunpack.c.l.b16 %v1724
        %v1759 = vunpack.c.l.b16 %v1725
        %v1760 = vunpack.c.l.b16 %v1726
        %v1761 = vpack.c.b16 %v1746, %v1745
        %v1762 = vpack.c.b16 %v1748, %v1747
        %v1763 = vpack.c.b16 %v1750, %v1749
        %v1764 = vpack.c.b16 %v1752, %v1751
        %v1765 = vpack.c.b16 %v1754, %v1753
        %v1766 = vpack.c.b16 %v1756, %v1755
        %v1767 = vpack.c.b16 %v1758, %v1757
        %v1768 = vpack.c.b16 %v1760, %v1759
        %1777 = vmatpush.bf16.msra.mxu0 %v1768
        %1778 = vmatpush.bf16.msra.mxu0 %v1767
        %1779 = vmatpush.bf16.msra.mxu0 %v1766
        %1780 = vmatpush.bf16.msra.mxu0 %v1765
        %1781 = vmatpush.bf16.msra.mxu0 %v1764
        %1782 = vmatpush.bf16.msra.mxu0 %v1763
        %1783 = vmatpush.bf16.msra.mxu0 %v1762
        %1784 = vmatpush.bf16.msra.mxu0 %v1761
        %1785 = vmatmul.bf16.gmra.mxu0 %v1709
        %v1786 = vpop.f32.mrf.mxu0
        %v1787 = vadd.f32 %v1728, %v1786
        %v1788 = vpop.f32.mrf.mxu0
        %1789 = vdwg.mxu0
        %v1790 = vmax.f32 %v1787, 0.0
        %v1791 = vadd.f32 %v1790, %v1626
        %v1792 = vpack.c.bf16 %v1791, %v1791
        %s1793 = scalar_lea.vmem [#allocation5], 576
        %v1794 = vld [vmem:[%s1793] sm:$0xf]
        %v1795 = vld [vmem:[%s1793 + $0x4] sm:$0xf]
        %v1796 = vld [vmem:[%s1793 + $0x8] sm:$0xf]
        %v1797 = vld [vmem:[%s1793 + $0xc] sm:$0xf]
        %v1798 = vld [vmem:[%s1793 + $0x10] sm:$0xf]
        %v1799 = vld [vmem:[%s1793 + $0x14] sm:$0xf]
        %v1800 = vld [vmem:[%s1793 + $0x18] sm:$0xf]
        %v1801 = vld [vmem:[%s1793 + $0x1c] sm:$0xf]
        %v1802 = vld [vmem:[%s1793 + $0x20] sm:$0xf]
        %v1803 = vld [vmem:[%s1793 + $0x24] sm:$0xf]
        %v1804 = vld [vmem:[%s1793 + $0x28] sm:$0xf]
        %v1805 = vld [vmem:[%s1793 + $0x2c] sm:$0xf]
        %v1806 = vld [vmem:[%s1793 + $0x30] sm:$0xf]
        %v1807 = vld [vmem:[%s1793 + $0x34] sm:$0xf]
        %v1808 = vld [vmem:[%s1793 + $0x38] sm:$0xf]
        %v1809 = vld [vmem:[%s1793 + $0x3c] sm:$0xf]
        %v1810 = vld [vmem:[#allocation7 + $0x9] sm:$0x1]
        %v1811 = vperm.slane %v1810, 0
        %v1828 = vunpack.c.l.b16 %v1794
        %v1829 = vunpack.c.l.b16 %v1795
        %v1830 = vunpack.c.l.b16 %v1796
        %v1831 = vunpack.c.l.b16 %v1797
        %v1832 = vunpack.c.l.b16 %v1798
        %v1833 = vunpack.c.l.b16 %v1799
        %v1834 = vunpack.c.l.b16 %v1800
        %v1835 = vunpack.c.l.b16 %v1801
        %v1836 = vunpack.c.l.b16 %v1802
        %v1837 = vunpack.c.l.b16 %v1803
        %v1838 = vunpack.c.l.b16 %v1804
        %v1839 = vunpack.c.l.b16 %v1805
        %v1840 = vunpack.c.l.b16 %v1806
        %v1841 = vunpack.c.l.b16 %v1807
        %v1842 = vunpack.c.l.b16 %v1808
        %v1843 = vunpack.c.l.b16 %v1809
        %v1844 = vpack.c.b16 %v1829, %v1828
        %v1845 = vpack.c.b16 %v1831, %v1830
        %v1846 = vpack.c.b16 %v1833, %v1832
        %v1847 = vpack.c.b16 %v1835, %v1834
        %v1848 = vpack.c.b16 %v1837, %v1836
        %v1849 = vpack.c.b16 %v1839, %v1838
        %v1850 = vpack.c.b16 %v1841, %v1840
        %v1851 = vpack.c.b16 %v1843, %v1842
        %1860 = vmatpush.bf16.msra.mxu0 %v1851
        %1861 = vmatpush.bf16.msra.mxu0 %v1850
        %1862 = vmatpush.bf16.msra.mxu0 %v1849
        %1863 = vmatpush.bf16.msra.mxu0 %v1848
        %1864 = vmatpush.bf16.msra.mxu0 %v1847
        %1865 = vmatpush.bf16.msra.mxu0 %v1846
        %1866 = vmatpush.bf16.msra.mxu0 %v1845
        %1867 = vmatpush.bf16.msra.mxu0 %v1844
        %1868 = vmatmul.bf16.gmra.mxu0 %v1792
        %v1869 = vpop.f32.mrf.mxu0
        %v1870 = vadd.f32 %v1811, %v1869
        %v1871 = vpop.f32.mrf.mxu0
        %1872 = vdwg.mxu0
        %v1873 = vmax.f32 %v1870, 0.0
        %v1874 = vpack.c.bf16 %v1873, %v1873
        %s1875 = scalar_lea.vmem [#allocation8], 576
        %v1876 = vld [vmem:[%s1875] sm:$0xf]
        %v1877 = vld [vmem:[%s1875 + $0x4] sm:$0xf]
        %v1878 = vld [vmem:[%s1875 + $0x8] sm:$0xf]
        %v1879 = vld [vmem:[%s1875 + $0xc] sm:$0xf]
        %v1880 = vld [vmem:[%s1875 + $0x10] sm:$0xf]
        %v1881 = vld [vmem:[%s1875 + $0x14] sm:$0xf]
        %v1882 = vld [vmem:[%s1875 + $0x18] sm:$0xf]
        %v1883 = vld [vmem:[%s1875 + $0x1c] sm:$0xf]
        %v1884 = vld [vmem:[%s1875 + $0x20] sm:$0xf]
        %v1885 = vld [vmem:[%s1875 + $0x24] sm:$0xf]
        %v1886 = vld [vmem:[%s1875 + $0x28] sm:$0xf]
        %v1887 = vld [vmem:[%s1875 + $0x2c] sm:$0xf]
        %v1888 = vld [vmem:[%s1875 + $0x30] sm:$0xf]
        %v1889 = vld [vmem:[%s1875 + $0x34] sm:$0xf]
        %v1890 = vld [vmem:[%s1875 + $0x38] sm:$0xf]
        %v1891 = vld [vmem:[%s1875 + $0x3c] sm:$0xf]
        %v1892 = vld [vmem:[#allocation10 + $0x9] sm:$0x1]
        %v1893 = vperm.slane %v1892, 0
        %v1910 = vunpack.c.l.b16 %v1876
        %v1911 = vunpack.c.l.b16 %v1877
        %v1912 = vunpack.c.l.b16 %v1878
        %v1913 = vunpack.c.l.b16 %v1879
        %v1914 = vunpack.c.l.b16 %v1880
        %v1915 = vunpack.c.l.b16 %v1881
        %v1916 = vunpack.c.l.b16 %v1882
        %v1917 = vunpack.c.l.b16 %v1883
        %v1918 = vunpack.c.l.b16 %v1884
        %v1919 = vunpack.c.l.b16 %v1885
        %v1920 = vunpack.c.l.b16 %v1886
        %v1921 = vunpack.c.l.b16 %v1887
        %v1922 = vunpack.c.l.b16 %v1888
        %v1923 = vunpack.c.l.b16 %v1889
        %v1924 = vunpack.c.l.b16 %v1890
        %v1925 = vunpack.c.l.b16 %v1891
        %v1926 = vpack.c.b16 %v1911, %v1910
        %v1927 = vpack.c.b16 %v1913, %v1912
        %v1928 = vpack.c.b16 %v1915, %v1914
        %v1929 = vpack.c.b16 %v1917, %v1916
        %v1930 = vpack.c.b16 %v1919, %v1918
        %v1931 = vpack.c.b16 %v1921, %v1920
        %v1932 = vpack.c.b16 %v1923, %v1922
        %v1933 = vpack.c.b16 %v1925, %v1924
        %1942 = vmatpush.bf16.msra.mxu0 %v1933
        %1943 = vmatpush.bf16.msra.mxu0 %v1932
        %1944 = vmatpush.bf16.msra.mxu0 %v1931
        %1945 = vmatpush.bf16.msra.mxu0 %v1930
        %1946 = vmatpush.bf16.msra.mxu0 %v1929
        %1947 = vmatpush.bf16.msra.mxu0 %v1928
        %1948 = vmatpush.bf16.msra.mxu0 %v1927
        %1949 = vmatpush.bf16.msra.mxu0 %v1926
        %1950 = vmatmul.bf16.gmra.mxu0 %v1874
        %v1951 = vpop.f32.mrf.mxu0
        %v1952 = vadd.f32 %v1893, %v1951
        %v1953 = vpop.f32.mrf.mxu0
        %1954 = vdwg.mxu0
        %v1955 = vmax.f32 %v1952, 0.0
        %v1956 = vadd.f32 %v1955, %v1791
        %1957 = vst [vmem:[%s307] sm:$0xff] %v1956
        %s1958 = sand.u32 %s142, 1
        %s1959 = scalar_lea.sflag [#allocation4], %s1958
        %s1960 = sand.u32 %s142, 1
        %s1961 = smul.addr %s1960, 8
        %s1962 = scalar_lea.vmem [#allocation11], %s1961
        // Predicated region
        $region61: #{tpu_custom_call.1} parent=39 // pred_check
          %p1963 = pneg %p152
        $region62: #{tpu_custom_call.1} parent=39 // pred_check_branch
          %1965 = sbr.rel (%p1963) target = $region64
        $region63: #{tpu_custom_call.1} parent=39 // pred_region
          %1967 = vsyncadd %s1959, 0
          %s1968 = smul.addr %s24, 8
          %s1969 = scalar_lea.hbm %s5, %s1968
          %s1971 = sshll.u32 %s1962, 4
          %s1972 = int_to_ptr.vmem [resolvable:$true] %s1971
          %s1973 = sshll.u32 %s1969, 4
          %s1974 = int_to_ptr.hbm [resolvable:$true] %s1973
          %1976 = dma.vmem_to_hbm [thread:$0]  %s1972, 128, %s1974, %s1959
        $region64: #{tpu_custom_call.1} parent=39 // pred_fallthru
          _
      $region40: #{tpu_custom_call.1} parent=5 // pred_fallthru
        _
      %p1977 = scmp.le.s32.totalorder 2, %s19
      // Predicated region
      $region65: #{tpu_custom_call.1} parent=5 // pred_check
        %p1978 = pneg %p1977
      $region66: #{tpu_custom_call.1} parent=5 // pred_check_branch
        %1980 = sbr.rel (%p1978) target = $region68
      $region67: #{tpu_custom_call.1} parent=5 // pred_region
        %s1981 = ssub.s32 %s19, 2
        // Predicated region
        $region69: #{tpu_custom_call.1} parent=67 // pred_check
          %p1982 = pneg %p158
        $region70: #{tpu_custom_call.1} parent=67 // pred_check_branch
          %1984 = sbr.rel (%p1982) target = $region72
        $region71: #{tpu_custom_call.1} parent=67 // pred_region
          %s1985 = sand.u32 %s143, 1
          %s1986 = scalar_lea.sflag [#allocation4], %s1985
          %s1987 = sand.u32 %s143, 1
          %s1988 = smul.addr %s1987, 8
          %s1989 = scalar_lea.vmem [#allocation11], %s1988
          %1991 = dma.done %s1986, 128
        $region72: #{tpu_custom_call.1} parent=67 // pred_fallthru
          _
      $region68: #{tpu_custom_call.1} parent=5 // pred_fallthru
        _
    $region6: #{tpu_custom_call.1} parent=1 // loop_footer
      %s23 = sadd.s32 1, %s19
    $region7: #{tpu_custom_call.1} parent=1 // loop_footer_branch
      %18 = sbr.rel target = $region3
    $region8: #{tpu_custom_call.1} parent=1 // loop_exit
      _
    %1992 = vsyncpa [#allocation3], 1
    %s1993 = scalar_lea.sflag [#allocation3], 1
    %1994 = vsyncpa %s1993, 1
    %1995 = vsyncpa [#allocation6], 1
    %1996 = vsyncpa [#allocation9], 1
    %1997 = vsyncpa [#allocation4], 1
    %s1998 = scalar_lea.sflag [#allocation4], 1
    %1999 = vsyncpa %s1998, 1

</llo_original>
